<compile_context>
chip_gen: v7x
topology: tpu7x:2x2x1
jax: 0.10.0
libtpu: 0.0.40
codegen_flags: <defaults>
</compile_context>

<pallas_src>
import functools

import jax
import jax.numpy as jnp
from jax.experimental import pallas as pl
from jax.experimental.pallas import tpu as pltpu

_VMEM_LIMIT = 32 * 1024 * 1024  # fits v5e/v6e default scoped & v7x physical


def _round_up(v, m):
    return ((v + m - 1) // m) * m


# ----------------------------- kernel bodies -----------------------------

def _xform_kernel(x_ref, dsrc_ref, w_ref, z_ref):
    """z = (d_src * x) @ W  -- source-degree scaling in f32, bf16 MXU dot."""
    x = x_ref[...].astype(jnp.float32) * dsrc_ref[...]              # (tm, Fin)
    z = jnp.dot(x.astype(jnp.bfloat16), w_ref[...],
                preferred_element_type=jnp.float32)                  # (tm, Fout)
    z_ref[...] = z.astype(z_ref.dtype)


def _prop_kernel_resident(adj_ref, z_ref, ddst_ref, b_ref, o_ref, acc_ref, *, tk):
    """out = d_dst * (A @ z) + b with z fully VMEM-resident (sliced by k)."""
    k = pl.program_id(1)

    @pl.when(k == 0)
    def _():
        acc_ref[...] = jnp.zeros_like(acc_ref)

    start = pl.multiple_of(k * tk, tk)
    z_blk = z_ref[pl.ds(start, tk), :]
    acc_ref[...] += jnp.dot(adj_ref[...], z_blk,
                            preferred_element_type=jnp.float32)

    @pl.when(k == pl.num_programs(1) - 1)
    def _():
        o_ref[...] = (acc_ref[...] * ddst_ref[...]
                      + b_ref[...]).astype(o_ref.dtype)


def _prop_kernel_tiled(adj_ref, z_ref, ddst_ref, b_ref, o_ref, acc_ref):
    """Same as above but z is streamed per source-node block (large graphs)."""
    k = pl.program_id(1)

    @pl.when(k == 0)
    def _():
        acc_ref[...] = jnp.zeros_like(acc_ref)

    acc_ref[...] += jnp.dot(adj_ref[...], z_ref[...],
                            preferred_element_type=jnp.float32)

    @pl.when(k == pl.num_programs(1) - 1)
    def _():
        o_ref[...] = (acc_ref[...] * ddst_ref[...]
                      + b_ref[...]).astype(o_ref.dtype)


# ----------------------------- pallas_call wrappers -----------------------------

def _feature_transform(h, d_src, w, *, tm):
    """(N, Fin) bf16, (N, 1) f32, (Fin, Fout) bf16 -> (N, Fout) bf16."""
    n, fin = h.shape
    fout = w.shape[1]
    return pl.pallas_call(
        _xform_kernel,
        out_shape=jax.ShapeDtypeStruct((n, fout), jnp.bfloat16),
        grid_spec=pltpu.PrefetchScalarGridSpec(
            num_scalar_prefetch=0,
            grid=(n // tm,),
            in_specs=[
                pl.BlockSpec((tm, fin), lambda i: (i, 0)),      # h tile
                pl.BlockSpec((tm, 1), lambda i: (i, 0)),        # d_src tile
                pl.BlockSpec((fin, fout), lambda i: (0, 0)),    # full W (resident)
            ],
            out_specs=pl.BlockSpec((tm, fout), lambda i: (i, 0)),
        ),
        compiler_params=pltpu.CompilerParams(
            dimension_semantics=("parallel",),
            vmem_limit_bytes=_VMEM_LIMIT),
    )(h, d_src, w)


def _propagate(adj_bf16, z_bf16, d_dst, bias, *, tm, tk, out_dtype, z_resident):
    """out = d_dst * (adj @ z) + bias; 2-D grid, source-node reduction last."""
    n = adj_bf16.shape[0]
    fout = z_bf16.shape[1]
    grid = (n // tm, n // tk)

    if z_resident:
        kernel = functools.partial(_prop_kernel_resident, tk=tk)
        z_spec = pl.BlockSpec((n, fout), lambda i, k: (0, 0))     # resident in VMEM
    else:
        kernel = _prop_kernel_tiled
        z_spec = pl.BlockSpec((tk, fout), lambda i, k: (k, 0))    # streamed per k

    return pl.pallas_call(
        kernel,
        out_shape=jax.ShapeDtypeStruct((n, fout), out_dtype),
        grid_spec=pltpu.PrefetchScalarGridSpec(
            num_scalar_prefetch=0,
            grid=grid,
            in_specs=[
                pl.BlockSpec((tm, tk), lambda i, k: (i, k)),      # adj tile
                z_spec,                                           # z
                pl.BlockSpec((tm, 1), lambda i, k: (i, 0)),       # d_dst tile
                pl.BlockSpec((1, fout), lambda i, k: (0, 0)),     # bias row
            ],
            out_specs=pl.BlockSpec((tm, fout), lambda i, k: (i, 0)),
            scratch_shapes=[pltpu.VMEM((tm, fout), jnp.float32)],
        ),
        compiler_params=pltpu.CompilerParams(
            dimension_semantics=("parallel", "arbitrary"),
            vmem_limit_bytes=_VMEM_LIMIT),
    )(adj_bf16, z_bf16, d_dst, bias)


# ----------------------------- full forward -----------------------------

@functools.partial(jax.jit, static_argnames=("residual", "tile"))
def gcn_multilayers_forward(adj, x, weights, biases, *, residual=0.0, tile=1024):
    """Forward of GCN_multilayers (conv='GCN', eval mode, defaults)."""
    n = adj.shape[0]
    in_feats = x.shape[1]
    h_feats = weights[0].shape[1]

    if residual != 0.0 and in_feats != h_feats:
        raise ValueError("residual != 0 requires in_feats == h_feats "
                         f"(got {in_feats} vs {h_feats})")

    n128 = _round_up(n, 128)
    t = min(tile, n128)                    # single tile size; no lcm blow-up
    n_pad = _round_up(n, t)
    fin_pad = _round_up(in_feats, 128)
    fh_pad = _round_up(h_feats, 128)

    # --- degrees: computed ONCE from the UNPADDED adjacency, f32 accumulation ---
    deg_in = jnp.sum(adj, axis=1, dtype=jnp.float32)     # dst in-degree
    deg_out = jnp.sum(adj, axis=0, dtype=jnp.float32)    # src out-degree
    d_dst = jax.lax.rsqrt(jnp.maximum(deg_in, 1.0))      # DGL clamp(min=1)
    d_src = jax.lax.rsqrt(jnp.maximum(deg_out, 1.0))
    d_dst = jnp.zeros((n_pad, 1), jnp.float32).at[:n, 0].set(d_dst)
    d_src = jnp.zeros((n_pad, 1), jnp.float32).at[:n, 0].set(d_src)

    # Adjacency padded directly in bf16 (0/1 edge weights are exact in bf16).
    adj_bf16 = jnp.zeros((n_pad, n_pad), jnp.bfloat16).at[:n, :n].set(
        adj.astype(jnp.bfloat16))

    # bf16 activations between layers; padded nodes/features are zero.
    h = jnp.zeros((n_pad, fin_pad), jnp.bfloat16).at[:n, :in_feats].set(
        x.astype(jnp.bfloat16))
    ori = None
    if residual != 0.0:
        ori = jnp.zeros((n_pad, fh_pad), jnp.float32).at[:n, :in_feats].set(
            x.astype(jnp.float32))

    # Keep z VMEM-resident across the propagate call when its double-buffered
    # footprint stays within a few MiB; otherwise stream it per source block.
    z_resident = (2 * n_pad * fh_pad * 2) <= (8 * 1024 * 1024)

    num_layers = len(weights)
    for l, (w, b) in enumerate(zip(weights, biases)):
        fi = in_feats if l == 0 else h_feats
        fi_pad = fin_pad if l == 0 else fh_pad
        w_p = jnp.zeros((fi_pad, fh_pad), jnp.bfloat16).at[:fi, :h_feats].set(
            w.astype(jnp.bfloat16))
        b_p = jnp.zeros((1, fh_pad), jnp.float32).at[0, :h_feats].set(
            b.astype(jnp.float32))

        last = (l == num_layers - 1)
        # Between layers: LayerNorm / ReLU disabled (norm=False, relu=False);
        # Dropout(0.2) is identity in eval mode.
        z = _feature_transform(h, d_src, w_p, tm=t)                 # (d_src*h) @ W
        h = _propagate(adj_bf16, z, d_dst, b_p, tm=t, tk=t,
                       out_dtype=jnp.float32 if last else jnp.bfloat16,
                       z_resident=z_resident)                        # d_dst*(A@z)+b
        if residual != 0.0:
            h = (h.astype(jnp.float32) + residual * ori).astype(h.dtype)

    return h[:n, :h_feats]


# ----------------------------- pure-JAX reference -----------------------------

def _reference(adj, x, weights, biases, residual=0.0):
    adj = adj.astype(jnp.float32)
    d_dst = jax.lax.rsqrt(jnp.maximum(adj.sum(axis=1), 1.0))[:, None]
    d_src = jax.lax.rsqrt(jnp.maximum(adj.sum(axis=0), 1.0))[:, None]
    h = x.astype(jnp.float32)
    ori = h
    for w, b in zip(weights, biases):
        z = (d_src * h) @ w.astype(jnp.float32)
        h = d_dst * (adj @ z) + b.astype(jnp.float32)
        if residual != 0.0:
            h = h + residual * ori
    return h


if __name__ == "__main__":
    key = jax.random.PRNGKey(0)
    k_adj, k_x, k_w0, k_w1, k_b0, k_b1 = jax.random.split(key, 6)

    N = 256          # nodes
    in_feats = 64
    h_feats = 32     # prop_step = 2 GraphConv layers

    # deterministic 0/1 directed adjacency, ~4% density
    adj = (jax.random.uniform(k_adj, (N, N)) < 0.04).astype(jnp.float32)
    x = jax.random.normal(k_x, (N, in_feats), jnp.float32)

    w0 = jax.random.normal(k_w0, (in_feats, h_feats), jnp.float32) * 0.1
    w1 = jax.random.normal(k_w1, (h_feats, h_feats), jnp.float32) * 0.1
    b0 = jax.random.normal(k_b0, (h_feats,), jnp.float32) * 0.01
    b1 = jax.random.normal(k_b1, (h_feats,), jnp.float32) * 0.01
    weights = (w0, w1)
    biases = (b0, b1)

    out = gcn_multilayers_forward(adj, x, weights, biases)
    out = jax.block_until_ready(out)

    ref = _reference(adj, x, weights, biases)
    rel_err = jnp.max(jnp.abs(out - ref)) / (jnp.max(jnp.abs(ref)) + 1e-6)

    assert out.shape == (N, h_feats), out.shape
    assert bool(rel_err < 5e-2), f"relative error too large: {rel_err}"
    print("KERNEL_OK")
</pallas_src>

<mosaic_0001>
module attributes {stable_mosaic.version = 11 : i64} {
  func.func @_prop_kernel_resident(%arg0: i32, %arg1: i32, %arg2: memref<256x256xbf16, #tpu.memory_space<vmem>>, %arg3: memref<256x128xbf16, #tpu.memory_space<vmem>>, %arg4: memref<256x1xf32, #tpu.memory_space<vmem>>, %arg5: memref<1x128xf32, #tpu.memory_space<vmem>>, %arg6: memref<256x128xf32, #tpu.memory_space<vmem>>, %arg7: memref<256x128xf32, #tpu.memory_space<vmem>>) attributes {dimension_semantics = [#tpu.dimension_semantics<parallel>, #tpu.dimension_semantics<arbitrary>], iteration_bounds = array<i64: 1, 1>, scalar_prefetch = 0 : i64, scratch_operands = 1 : i64, tpu.core_type = #tpu.core_type<tc>, window_params = [{transform_indices = @transform_0, window_bounds = array<i64: 256, 256>}, {pipeline_mode = #tpu.pipeline_mode<synchronous>, transform_indices = @transform_1, window_bounds = array<i64: 256, 128>}, {transform_indices = @transform_2, window_bounds = array<i64: 256, 1>}, {pipeline_mode = #tpu.pipeline_mode<synchronous>, transform_indices = @transform_3, window_bounds = array<i64: 1, 128>}, {transform_indices = @transform_4, window_bounds = array<i64: 256, 128>}]} {
    %c0_i32 = arith.constant 0 : i32
    %0 = arith.cmpi eq, %arg1, %c0_i32 : i32
    %1 = arith.extui %0 : i1 to i32
    %c0_i32_0 = arith.constant 0 : i32
    %2 = arith.cmpi ne, %1, %c0_i32_0 : i32
    scf.if %2 {
      %cst_9 = arith.constant 0.000000e+00 : f32
      %15 = vector.broadcast %cst_9 : f32 to vector<256x128xf32>
      %c0_10 = arith.constant 0 : index
      %c0_11 = arith.constant 0 : index
      %16 = vector.load %arg7[%c0_10, %c0_11] : memref<256x128xf32, #tpu.memory_space<vmem>>, vector<256x128xf32>
      tpu.vector_store %arg7[%c0_10, %c0_11], %15 {strides = array<i32>} : memref<256x128xf32, #tpu.memory_space<vmem>>, vector<256x128xf32>,
    } else {
    }
    %c256_i32 = arith.constant 256 : i32
    %3 = arith.muli %arg1, %c256_i32 : i32
    %4 = tpu.assume_multiple %3, 256 : i32
    %5 = arith.index_cast %4 : i32 to index
    %c0 = arith.constant 0 : index
    %6 = vector.load %arg3[%5, %c0] : memref<256x128xbf16, #tpu.memory_space<vmem>>, vector<256x128xbf16>
    %c0_1 = arith.constant 0 : index
    %c0_2 = arith.constant 0 : index
    %7 = vector.load %arg7[%c0_1, %c0_2] : memref<256x128xf32, #tpu.memory_space<vmem>>, vector<256x128xf32>
    %c0_3 = arith.constant 0 : index
    %c0_4 = arith.constant 0 : index
    %8 = vector.load %arg2[%c0_3, %c0_4] : memref<256x256xbf16, #tpu.memory_space<vmem>>, vector<256x256xbf16>
    %cst = arith.constant dense<0.000000e+00> : vector<256x128xf32>
    %9 = tpu.matmul %8, %6, %cst {dimension_numbers = #tpu.dot_dimension_numbers<[1], [0], [0], [1], [0, 0, 1, 1], [], []>} : vector<256x256xbf16>, vector<256x128xbf16>, vector<256x128xf32> -> vector<256x128xf32>
    %10 = arith.addf %7, %9 : vector<256x128xf32>
    %c0_5 = arith.constant 0 : index
    %c0_6 = arith.constant 0 : index
    %11 = vector.load %arg7[%c0_5, %c0_6] : memref<256x128xf32, #tpu.memory_space<vmem>>, vector<256x128xf32>
    tpu.vector_store %arg7[%c0_5, %c0_6], %10 {strides = array<i32>} : memref<256x128xf32, #tpu.memory_space<vmem>>, vector<256x128xf32>,
    %c0_i32_7 = arith.constant 0 : i32
    %12 = arith.cmpi eq, %arg1, %c0_i32_7 : i32
    %13 = arith.extui %12 : i1 to i32
    %c0_i32_8 = arith.constant 0 : i32
    %14 = arith.cmpi ne, %13, %c0_i32_8 : i32
    scf.if %14 {
      %c0_9 = arith.constant 0 : index
      %c0_10 = arith.constant 0 : index
      %15 = vector.load %arg7[%c0_9, %c0_10] : memref<256x128xf32, #tpu.memory_space<vmem>>, vector<256x128xf32>
      %c0_11 = arith.constant 0 : index
      %c0_12 = arith.constant 0 : index
      %16 = vector.load %arg4[%c0_11, %c0_12] : memref<256x1xf32, #tpu.memory_space<vmem>>, vector<256x1xf32>
      %17 = vector.broadcast %16 : vector<256x1xf32> to vector<256x128xf32>
      %18 = arith.mulf %15, %17 : vector<256x128xf32>
      %c0_13 = arith.constant 0 : index
      %c0_14 = arith.constant 0 : index
      %19 = vector.load %arg5[%c0_13, %c0_14] : memref<1x128xf32, #tpu.memory_space<vmem>>, vector<1x128xf32>
      %20 = vector.broadcast %19 : vector<1x128xf32> to vector<256x128xf32>
      %21 = arith.addf %18, %20 : vector<256x128xf32>
      %c0_15 = arith.constant 0 : index
      %c0_16 = arith.constant 0 : index
      %22 = vector.load %arg6[%c0_15, %c0_16] : memref<256x128xf32, #tpu.memory_space<vmem>>, vector<256x128xf32>
      tpu.vector_store %arg6[%c0_15, %c0_16], %21 {strides = array<i32>} : memref<256x128xf32, #tpu.memory_space<vmem>>, vector<256x128xf32>,
    } else {
    }
    return
  }
  func.func @transform_0(%arg0: i32, %arg1: i32) -> (i32, i32) {
    %c0_i32 = arith.constant 0 : i32
    return %arg0, %arg1 : i32, i32
  }
  func.func @transform_1(%arg0: i32, %arg1: i32) -> (i32, i32) {
    %c0_i32 = arith.constant 0 : i32
    %c0_i32_0 = arith.constant 0 : i32
    %c0_i32_1 = arith.constant 0 : i32
    return %c0_i32, %c0_i32_0 : i32, i32
  }
  func.func @transform_2(%arg0: i32, %arg1: i32) -> (i32, i32) {
    %c0_i32 = arith.constant 0 : i32
    %c0_i32_0 = arith.constant 0 : i32
    return %arg0, %c0_i32 : i32, i32
  }
  func.func @transform_3(%arg0: i32, %arg1: i32) -> (i32, i32) {
    %c0_i32 = arith.constant 0 : i32
    %c0_i32_0 = arith.constant 0 : i32
    %c0_i32_1 = arith.constant 0 : i32
    return %c0_i32, %c0_i32_0 : i32, i32
  }
  func.func @transform_4(%arg0: i32, %arg1: i32) -> (i32, i32) {
    %c0_i32 = arith.constant 0 : i32
    %c0_i32_0 = arith.constant 0 : i32
    return %arg0, %c0_i32 : i32, i32
  }
}

module attributes {stable_mosaic.version = 11 : i64} {
  func.func @_xform_kernel(%arg0: i32, %arg1: memref<256x128xbf16, #tpu.memory_space<vmem>>, %arg2: memref<256x1xf32, #tpu.memory_space<vmem>>, %arg3: memref<128x128xbf16, #tpu.memory_space<vmem>>, %arg4: memref<256x128xbf16, #tpu.memory_space<vmem>>) attributes {dimension_semantics = [#tpu.dimension_semantics<parallel>], iteration_bounds = array<i64: 1>, scalar_prefetch = 0 : i64, scratch_operands = 0 : i64, tpu.core_type = #tpu.core_type<tc>, window_params = [{transform_indices = @transform_0, window_bounds = array<i64: 256, 128>}, {transform_indices = @transform_1, window_bounds = array<i64: 256, 1>}, {pipeline_mode = #tpu.pipeline_mode<synchronous>, transform_indices = @transform_2, window_bounds = array<i64: 128, 128>}, {transform_indices = @transform_3, window_bounds = array<i64: 256, 128>}]} {
    %c0 = arith.constant 0 : index
    %c0_0 = arith.constant 0 : index
    %0 = vector.load %arg1[%c0, %c0_0] : memref<256x128xbf16, #tpu.memory_space<vmem>>, vector<256x128xbf16>
    %1 = arith.extf %0 : vector<256x128xbf16> to vector<256x128xf32>
    %c0_1 = arith.constant 0 : index
    %c0_2 = arith.constant 0 : index
    %2 = vector.load %arg2[%c0_1, %c0_2] : memref<256x1xf32, #tpu.memory_space<vmem>>, vector<256x1xf32>
    %3 = vector.broadcast %2 : vector<256x1xf32> to vector<256x128xf32>
    %4 = arith.mulf %1, %3 : vector<256x128xf32>
    %5 = arith.truncf %4 : vector<256x128xf32> to vector<256x128xbf16>
    %c0_3 = arith.constant 0 : index
    %c0_4 = arith.constant 0 : index
    %6 = vector.load %arg3[%c0_3, %c0_4] : memref<128x128xbf16, #tpu.memory_space<vmem>>, vector<128x128xbf16>
    %cst = arith.constant dense<0.000000e+00> : vector<256x128xf32>
    %7 = tpu.matmul %5, %6, %cst {dimension_numbers = #tpu.dot_dimension_numbers<[1], [0], [0], [1], [0, 0, 1, 1], [], []>} : vector<256x128xbf16>, vector<128x128xbf16>, vector<256x128xf32> -> vector<256x128xf32>
    %8 = arith.truncf %7 : vector<256x128xf32> to vector<256x128xbf16>
    %c0_5 = arith.constant 0 : index
    %c0_6 = arith.constant 0 : index
    %9 = vector.load %arg4[%c0_5, %c0_6] : memref<256x128xbf16, #tpu.memory_space<vmem>>, vector<256x128xbf16>
    tpu.vector_store %arg4[%c0_5, %c0_6], %8 {strides = array<i32>} : memref<256x128xbf16, #tpu.memory_space<vmem>>, vector<256x128xbf16>,
    return
  }
  func.func @transform_0(%arg0: i32) -> (i32, i32) {
    %c0_i32 = arith.constant 0 : i32
    %c0_i32_0 = arith.constant 0 : i32
    return %arg0, %c0_i32 : i32, i32
  }
  func.func @transform_1(%arg0: i32) -> (i32, i32) {
    %c0_i32 = arith.constant 0 : i32
    %c0_i32_0 = arith.constant 0 : i32
    return %arg0, %c0_i32 : i32, i32
  }
  func.func @transform_2(%arg0: i32) -> (i32, i32) {
    %c0_i32 = arith.constant 0 : i32
    %c0_i32_0 = arith.constant 0 : i32
    %c0_i32_1 = arith.constant 0 : i32
    return %c0_i32, %c0_i32_0 : i32, i32
  }
  func.func @transform_3(%arg0: i32) -> (i32, i32) {
    %c0_i32 = arith.constant 0 : i32
    %c0_i32_0 = arith.constant 0 : i32
    return %arg0, %c0_i32 : i32, i32
  }
}

module attributes {stable_mosaic.version = 11 : i64} {
  func.func @_prop_kernel_resident(%arg0: i32, %arg1: i32, %arg2: memref<256x256xbf16, #tpu.memory_space<vmem>>, %arg3: memref<256x128xbf16, #tpu.memory_space<vmem>>, %arg4: memref<256x1xf32, #tpu.memory_space<vmem>>, %arg5: memref<1x128xf32, #tpu.memory_space<vmem>>, %arg6: memref<256x128xbf16, #tpu.memory_space<vmem>>, %arg7: memref<256x128xf32, #tpu.memory_space<vmem>>) attributes {dimension_semantics = [#tpu.dimension_semantics<parallel>, #tpu.dimension_semantics<arbitrary>], iteration_bounds = array<i64: 1, 1>, scalar_prefetch = 0 : i64, scratch_operands = 1 : i64, tpu.core_type = #tpu.core_type<tc>, window_params = [{transform_indices = @transform_0, window_bounds = array<i64: 256, 256>}, {pipeline_mode = #tpu.pipeline_mode<synchronous>, transform_indices = @transform_1, window_bounds = array<i64: 256, 128>}, {transform_indices = @transform_2, window_bounds = array<i64: 256, 1>}, {pipeline_mode = #tpu.pipeline_mode<synchronous>, transform_indices = @transform_3, window_bounds = array<i64: 1, 128>}, {transform_indices = @transform_4, window_bounds = array<i64: 256, 128>}]} {
    %c0_i32 = arith.constant 0 : i32
    %0 = arith.cmpi eq, %arg1, %c0_i32 : i32
    %1 = arith.extui %0 : i1 to i32
    %c0_i32_0 = arith.constant 0 : i32
    %2 = arith.cmpi ne, %1, %c0_i32_0 : i32
    scf.if %2 {
      %cst_9 = arith.constant 0.000000e+00 : f32
      %15 = vector.broadcast %cst_9 : f32 to vector<256x128xf32>
      %c0_10 = arith.constant 0 : index
      %c0_11 = arith.constant 0 : index
      %16 = vector.load %arg7[%c0_10, %c0_11] : memref<256x128xf32, #tpu.memory_space<vmem>>, vector<256x128xf32>
      tpu.vector_store %arg7[%c0_10, %c0_11], %15 {strides = array<i32>} : memref<256x128xf32, #tpu.memory_space<vmem>>, vector<256x128xf32>,
    } else {
    }
    %c256_i32 = arith.constant 256 : i32
    %3 = arith.muli %arg1, %c256_i32 : i32
    %4 = tpu.assume_multiple %3, 256 : i32
    %5 = arith.index_cast %4 : i32 to index
    %c0 = arith.constant 0 : index
    %6 = vector.load %arg3[%5, %c0] : memref<256x128xbf16, #tpu.memory_space<vmem>>, vector<256x128xbf16>
    %c0_1 = arith.constant 0 : index
    %c0_2 = arith.constant 0 : index
    %7 = vector.load %arg7[%c0_1, %c0_2] : memref<256x128xf32, #tpu.memory_space<vmem>>, vector<256x128xf32>
    %c0_3 = arith.constant 0 : index
    %c0_4 = arith.constant 0 : index
    %8 = vector.load %arg2[%c0_3, %c0_4] : memref<256x256xbf16, #tpu.memory_space<vmem>>, vector<256x256xbf16>
    %cst = arith.constant dense<0.000000e+00> : vector<256x128xf32>
    %9 = tpu.matmul %8, %6, %cst {dimension_numbers = #tpu.dot_dimension_numbers<[1], [0], [0], [1], [0, 0, 1, 1], [], []>} : vector<256x256xbf16>, vector<256x128xbf16>, vector<256x128xf32> -> vector<256x128xf32>
    %10 = arith.addf %7, %9 : vector<256x128xf32>
    %c0_5 = arith.constant 0 : index
    %c0_6 = arith.constant 0 : index
    %11 = vector.load %arg7[%c0_5, %c0_6] : memref<256x128xf32, #tpu.memory_space<vmem>>, vector<256x128xf32>
    tpu.vector_store %arg7[%c0_5, %c0_6], %10 {strides = array<i32>} : memref<256x128xf32, #tpu.memory_space<vmem>>, vector<256x128xf32>,
    %c0_i32_7 = arith.constant 0 : i32
    %12 = arith.cmpi eq, %arg1, %c0_i32_7 : i32
    %13 = arith.extui %12 : i1 to i32
    %c0_i32_8 = arith.constant 0 : i32
    %14 = arith.cmpi ne, %13, %c0_i32_8 : i32
    scf.if %14 {
      %c0_9 = arith.constant 0 : index
      %c0_10 = arith.constant 0 : index
      %15 = vector.load %arg7[%c0_9, %c0_10] : memref<256x128xf32, #tpu.memory_space<vmem>>, vector<256x128xf32>
      %c0_11 = arith.constant 0 : index
      %c0_12 = arith.constant 0 : index
      %16 = vector.load %arg4[%c0_11, %c0_12] : memref<256x1xf32, #tpu.memory_space<vmem>>, vector<256x1xf32>
      %17 = vector.broadcast %16 : vector<256x1xf32> to vector<256x128xf32>
      %18 = arith.mulf %15, %17 : vector<256x128xf32>
      %c0_13 = arith.constant 0 : index
      %c0_14 = arith.constant 0 : index
      %19 = vector.load %arg5[%c0_13, %c0_14] : memref<1x128xf32, #tpu.memory_space<vmem>>, vector<1x128xf32>
      %20 = vector.broadcast %19 : vector<1x128xf32> to vector<256x128xf32>
      %21 = arith.addf %18, %20 : vector<256x128xf32>
      %22 = arith.truncf %21 : vector<256x128xf32> to vector<256x128xbf16>
      %c0_15 = arith.constant 0 : index
      %c0_16 = arith.constant 0 : index
      %23 = vector.load %arg6[%c0_15, %c0_16] : memref<256x128xbf16, #tpu.memory_space<vmem>>, vector<256x128xbf16>
      tpu.vector_store %arg6[%c0_15, %c0_16], %22 {strides = array<i32>} : memref<256x128xbf16, #tpu.memory_space<vmem>>, vector<256x128xbf16>,
    } else {
    }
    return
  }
  func.func @transform_0(%arg0: i32, %arg1: i32) -> (i32, i32) {
    %c0_i32 = arith.constant 0 : i32
    return %arg0, %arg1 : i32, i32
  }
  func.func @transform_1(%arg0: i32, %arg1: i32) -> (i32, i32) {
    %c0_i32 = arith.constant 0 : i32
    %c0_i32_0 = arith.constant 0 : i32
    %c0_i32_1 = arith.constant 0 : i32
    return %c0_i32, %c0_i32_0 : i32, i32
  }
  func.func @transform_2(%arg0: i32, %arg1: i32) -> (i32, i32) {
    %c0_i32 = arith.constant 0 : i32
    %c0_i32_0 = arith.constant 0 : i32
    return %arg0, %c0_i32 : i32, i32
  }
  func.func @transform_3(%arg0: i32, %arg1: i32) -> (i32, i32) {
    %c0_i32 = arith.constant 0 : i32
    %c0_i32_0 = arith.constant 0 : i32
    %c0_i32_1 = arith.constant 0 : i32
    return %c0_i32, %c0_i32_0 : i32, i32
  }
  func.func @transform_4(%arg0: i32, %arg1: i32) -> (i32, i32) {
    %c0_i32 = arith.constant 0 : i32
    %c0_i32_0 = arith.constant 0 : i32
    return %arg0, %c0_i32 : i32, i32
  }
}

</mosaic_0001>

<llo_original>
// kernel: gcn_multilayers_forward.4
$region0: #{gcn_multilayers_forward.4}
  #allocation0 [shape = 'u32[]', space=smem, size = 0x4, offset = 0x4, fixed_abs, tag = 'smem constant byte address 0x4 - core index']
  #allocation1 [shape = 'u32[144,128]{1,0:T(1,128)}', space=vmem, size = 0x12000, scoped, tag = 'internal scratch']
  %s0 = inlined_call_operand.vmem [shape: bf16[256,128], index: 0, kind: input, shape index: {}]
  %s1 = inlined_call_operand.vmem [shape: f32[256,1], index: 1, kind: input, shape index: {}]
  %s2 = inlined_call_operand.vmem [shape: bf16[128,128], index: 2, kind: input, shape index: {}]
  %s3 = inlined_call_operand.vmem [shape: bf16[256,128], index: 3, kind: output, shape index: {}]
  %s4 = sld [smem:[#allocation0]]
  $region22: #{gcn_multilayers_forward.4} parent=0
    _
  %s6 = ssub.s32 1, %s4
  %s7 = scalar_select 0, %s6, %s4
  // Predicated region
  $region2: #{gcn_multilayers_forward.4} parent=0 // pred_check
    _
  $region3: #{gcn_multilayers_forward.4} parent=0 // pred_check_branch
    %9 = sbr.rel (0) target = $region5
  $region4: #{gcn_multilayers_forward.4} parent=0 // pred_region
    _
  $region5: #{gcn_multilayers_forward.4} parent=0 // pred_fallthru
    _
  // Predicated region
  $region6: #{gcn_multilayers_forward.4} parent=0 // pred_check
    _
  $region7: #{gcn_multilayers_forward.4} parent=0 // pred_check_branch
    %11 = sbr.rel (0) target = $region9
  $region8: #{gcn_multilayers_forward.4} parent=0 // pred_region
    _
  $region9: #{gcn_multilayers_forward.4} parent=0 // pred_fallthru
    _
  // Predicated region
  $region10: #{gcn_multilayers_forward.4} parent=0 // pred_check
    _
  $region11: #{gcn_multilayers_forward.4} parent=0 // pred_check_branch
    %13 = sbr.rel (0) target = $region13
  $region12: #{gcn_multilayers_forward.4} parent=0 // pred_region
    _
  $region13: #{gcn_multilayers_forward.4} parent=0 // pred_fallthru
    _
  %v15 = vld [vmem:[%s0] sm:$0xf]
  %v16 = vld [vmem:[%s0 + $0x4] sm:$0xf]
  %v17 = vld [vmem:[%s0 + $0x8] sm:$0xf]
  %v18 = vld [vmem:[%s0 + $0xc] sm:$0xf]
  %v19 = vld [vmem:[%s0 + $0x10] sm:$0xf]
  %v20 = vld [vmem:[%s0 + $0x14] sm:$0xf]
  %v21 = vld [vmem:[%s0 + $0x18] sm:$0xf]
  %v22 = vld [vmem:[%s0 + $0x1c] sm:$0xf]
  %v23 = vld [vmem:[%s0 + $0x20] sm:$0xf]
  %v24 = vld [vmem:[%s0 + $0x24] sm:$0xf]
  %v25 = vld [vmem:[%s0 + $0x28] sm:$0xf]
  %v26 = vld [vmem:[%s0 + $0x2c] sm:$0xf]
  %v27 = vld [vmem:[%s0 + $0x30] sm:$0xf]
  %v28 = vld [vmem:[%s0 + $0x34] sm:$0xf]
  %v29 = vld [vmem:[%s0 + $0x38] sm:$0xf]
  %v30 = vld [vmem:[%s0 + $0x3c] sm:$0xf]
  %v31 = vld [vmem:[%s0 + $0x40] sm:$0xf]
  %v32 = vld [vmem:[%s0 + $0x44] sm:$0xf]
  %v33 = vld [vmem:[%s0 + $0x48] sm:$0xf]
  %v34 = vld [vmem:[%s0 + $0x4c] sm:$0xf]
  %v35 = vld [vmem:[%s0 + $0x50] sm:$0xf]
  %v36 = vld [vmem:[%s0 + $0x54] sm:$0xf]
  %v37 = vld [vmem:[%s0 + $0x58] sm:$0xf]
  %v38 = vld [vmem:[%s0 + $0x5c] sm:$0xf]
  %v39 = vld [vmem:[%s0 + $0x60] sm:$0xf]
  %v40 = vld [vmem:[%s0 + $0x64] sm:$0xf]
  %v41 = vld [vmem:[%s0 + $0x68] sm:$0xf]
  %v42 = vld [vmem:[%s0 + $0x6c] sm:$0xf]
  %v43 = vld [vmem:[%s0 + $0x70] sm:$0xf]
  %v44 = vld [vmem:[%s0 + $0x74] sm:$0xf]
  %v45 = vld [vmem:[%s0 + $0x78] sm:$0xf]
  %v46 = vld [vmem:[%s0 + $0x7c] sm:$0xf]
  %v47 = vunpack.c.l.bf16 %v15
  %v48 = vunpack.c.l.bf16 %v16
  %v49 = vunpack.c.l.bf16 %v17
  %v50 = vunpack.c.l.bf16 %v18
  %v51 = vunpack.c.l.bf16 %v19
  %v52 = vunpack.c.l.bf16 %v20
  %v53 = vunpack.c.l.bf16 %v21
  %v54 = vunpack.c.l.bf16 %v22
  %v55 = vunpack.c.l.bf16 %v23
  %v56 = vunpack.c.l.bf16 %v24
  %v57 = vunpack.c.l.bf16 %v25
  %v58 = vunpack.c.l.bf16 %v26
  %v59 = vunpack.c.l.bf16 %v27
  %v60 = vunpack.c.l.bf16 %v28
  %v61 = vunpack.c.l.bf16 %v29
  %v62 = vunpack.c.l.bf16 %v30
  %v63 = vunpack.c.l.bf16 %v31
  %v64 = vunpack.c.l.bf16 %v32
  %v65 = vunpack.c.l.bf16 %v33
  %v66 = vunpack.c.l.bf16 %v34
  %v67 = vunpack.c.l.bf16 %v35
  %v68 = vunpack.c.l.bf16 %v36
  %v69 = vunpack.c.l.bf16 %v37
  %v70 = vunpack.c.l.bf16 %v38
  %v71 = vunpack.c.l.bf16 %v39
  %v72 = vunpack.c.l.bf16 %v40
  %v73 = vunpack.c.l.bf16 %v41
  %v74 = vunpack.c.l.bf16 %v42
  %v75 = vunpack.c.l.bf16 %v43
  %v76 = vunpack.c.l.bf16 %v44
  %v77 = vunpack.c.l.bf16 %v45
  %v78 = vunpack.c.l.bf16 %v46
  %v79 = vld [vmem:[%s1] sm:$0xff]
  %v80 = vld [vmem:[%s1 + $0x8] sm:$0xff]
  %v81 = vld [vmem:[%s1 + $0x10] sm:$0xff]
  %v82 = vld [vmem:[%s1 + $0x18] sm:$0xff]
  %v83 = vld [vmem:[%s1 + $0x20] sm:$0xff]
  %v84 = vld [vmem:[%s1 + $0x28] sm:$0xff]
  %v85 = vld [vmem:[%s1 + $0x30] sm:$0xff]
  %v86 = vld [vmem:[%s1 + $0x38] sm:$0xff]
  %v87 = vld [vmem:[%s1 + $0x40] sm:$0xff]
  %v88 = vld [vmem:[%s1 + $0x48] sm:$0xff]
  %v89 = vld [vmem:[%s1 + $0x50] sm:$0xff]
  %v90 = vld [vmem:[%s1 + $0x58] sm:$0xff]
  %v91 = vld [vmem:[%s1 + $0x60] sm:$0xff]
  %v92 = vld [vmem:[%s1 + $0x68] sm:$0xff]
  %v93 = vld [vmem:[%s1 + $0x70] sm:$0xff]
  %v94 = vld [vmem:[%s1 + $0x78] sm:$0xff]
  %v95 = vld [vmem:[%s1 + $0x80] sm:$0xff]
  %v96 = vld [vmem:[%s1 + $0x88] sm:$0xff]
  %v97 = vld [vmem:[%s1 + $0x90] sm:$0xff]
  %v98 = vld [vmem:[%s1 + $0x98] sm:$0xff]
  %v99 = vld [vmem:[%s1 + $0xa0] sm:$0xff]
  %v100 = vld [vmem:[%s1 + $0xa8] sm:$0xff]
  %v101 = vld [vmem:[%s1 + $0xb0] sm:$0xff]
  %v102 = vld [vmem:[%s1 + $0xb8] sm:$0xff]
  %v103 = vld [vmem:[%s1 + $0xc0] sm:$0xff]
  %v104 = vld [vmem:[%s1 + $0xc8] sm:$0xff]
  %v105 = vld [vmem:[%s1 + $0xd0] sm:$0xff]
  %v106 = vld [vmem:[%s1 + $0xd8] sm:$0xff]
  %v107 = vld [vmem:[%s1 + $0xe0] sm:$0xff]
  %v108 = vld [vmem:[%s1 + $0xe8] sm:$0xff]
  %v109 = vld [vmem:[%s1 + $0xf0] sm:$0xff]
  %v110 = vld [vmem:[%s1 + $0xf8] sm:$0xff]
  %112 = vset.pattern.permute.xlu0 0
  %113 = vperm.xlu0 %112, %v79
  %v114 = vpop.permute.xlu0 %113
  %117 = vset.pattern.permute.xlu0 0
  %118 = vperm.xlu0 %117, %v80
  %v119 = vpop.permute.xlu0 %118
  %122 = vset.pattern.permute.xlu0 0
  %123 = vperm.xlu0 %122, %v81
  %v124 = vpop.permute.xlu0 %123
  %127 = vset.pattern.permute.xlu0 0
  %128 = vperm.xlu0 %127, %v82
  %v129 = vpop.permute.xlu0 %128
  %132 = vset.pattern.permute.xlu0 0
  %133 = vperm.xlu0 %132, %v83
  %v134 = vpop.permute.xlu0 %133
  %137 = vset.pattern.permute.xlu0 0
  %138 = vperm.xlu0 %137, %v84
  %v139 = vpop.permute.xlu0 %138
  %142 = vset.pattern.permute.xlu0 0
  %143 = vperm.xlu0 %142, %v85
  %v144 = vpop.permute.xlu0 %143
  %147 = vset.pattern.permute.xlu0 0
  %148 = vperm.xlu0 %147, %v86
  %v149 = vpop.permute.xlu0 %148
  %152 = vset.pattern.permute.xlu0 0
  %153 = vperm.xlu0 %152, %v87
  %v154 = vpop.permute.xlu0 %153
  %157 = vset.pattern.permute.xlu0 0
  %158 = vperm.xlu0 %157, %v88
  %v159 = vpop.permute.xlu0 %158
  %162 = vset.pattern.permute.xlu0 0
  %163 = vperm.xlu0 %162, %v89
  %v164 = vpop.permute.xlu0 %163
  %167 = vset.pattern.permute.xlu0 0
  %168 = vperm.xlu0 %167, %v90
  %v169 = vpop.permute.xlu0 %168
  %172 = vset.pattern.permute.xlu0 0
  %173 = vperm.xlu0 %172, %v91
  %v174 = vpop.permute.xlu0 %173
  %177 = vset.pattern.permute.xlu0 0
  %178 = vperm.xlu0 %177, %v92
  %v179 = vpop.permute.xlu0 %178
  %182 = vset.pattern.permute.xlu0 0
  %183 = vperm.xlu0 %182, %v93
  %v184 = vpop.permute.xlu0 %183
  %187 = vset.pattern.permute.xlu0 0
  %188 = vperm.xlu0 %187, %v94
  %v189 = vpop.permute.xlu0 %188
  %192 = vset.pattern.permute.xlu0 0
  %193 = vperm.xlu0 %192, %v95
  %v194 = vpop.permute.xlu0 %193
  %197 = vset.pattern.permute.xlu0 0
  %198 = vperm.xlu0 %197, %v96
  %v199 = vpop.permute.xlu0 %198
  %202 = vset.pattern.permute.xlu0 0
  %203 = vperm.xlu0 %202, %v97
  %v204 = vpop.permute.xlu0 %203
  %207 = vset.pattern.permute.xlu0 0
  %208 = vperm.xlu0 %207, %v98
  %v209 = vpop.permute.xlu0 %208
  %212 = vset.pattern.permute.xlu0 0
  %213 = vperm.xlu0 %212, %v99
  %v214 = vpop.permute.xlu0 %213
  %217 = vset.pattern.permute.xlu0 0
  %218 = vperm.xlu0 %217, %v100
  %v219 = vpop.permute.xlu0 %218
  %222 = vset.pattern.permute.xlu0 0
  %223 = vperm.xlu0 %222, %v101
  %v224 = vpop.permute.xlu0 %223
  %227 = vset.pattern.permute.xlu0 0
  %228 = vperm.xlu0 %227, %v102
  %v229 = vpop.permute.xlu0 %228
  %232 = vset.pattern.permute.xlu0 0
  %233 = vperm.xlu0 %232, %v103
  %v234 = vpop.permute.xlu0 %233
  %237 = vset.pattern.permute.xlu0 0
  %238 = vperm.xlu0 %237, %v104
  %v239 = vpop.permute.xlu0 %238
  %242 = vset.pattern.permute.xlu0 0
  %243 = vperm.xlu0 %242, %v105
  %v244 = vpop.permute.xlu0 %243
  %247 = vset.pattern.permute.xlu0 0
  %248 = vperm.xlu0 %247, %v106
  %v249 = vpop.permute.xlu0 %248
  %252 = vset.pattern.permute.xlu0 0
  %253 = vperm.xlu0 %252, %v107
  %v254 = vpop.permute.xlu0 %253
  %257 = vset.pattern.permute.xlu0 0
  %258 = vperm.xlu0 %257, %v108
  %v259 = vpop.permute.xlu0 %258
  %262 = vset.pattern.permute.xlu0 0
  %263 = vperm.xlu0 %262, %v109
  %v264 = vpop.permute.xlu0 %263
  %267 = vset.pattern.permute.xlu0 0
  %268 = vperm.xlu0 %267, %v110
  %v269 = vpop.permute.xlu0 %268
  %v271 = vmul.f32 %v47, %v114
  %v272 = vmul.f32 %v48, %v119
  %v273 = vmul.f32 %v49, %v124
  %v274 = vmul.f32 %v50, %v129
  %v275 = vmul.f32 %v51, %v134
  %v276 = vmul.f32 %v52, %v139
  %v277 = vmul.f32 %v53, %v144
  %v278 = vmul.f32 %v54, %v149
  %v279 = vmul.f32 %v55, %v154
  %v280 = vmul.f32 %v56, %v159
  %v281 = vmul.f32 %v57, %v164
  %v282 = vmul.f32 %v58, %v169
  %v283 = vmul.f32 %v59, %v174
  %v284 = vmul.f32 %v60, %v179
  %v285 = vmul.f32 %v61, %v184
  %v286 = vmul.f32 %v62, %v189
  %v287 = vmul.f32 %v63, %v194
  %v288 = vmul.f32 %v64, %v199
  %v289 = vmul.f32 %v65, %v204
  %v290 = vmul.f32 %v66, %v209
  %v291 = vmul.f32 %v67, %v214
  %v292 = vmul.f32 %v68, %v219
  %v293 = vmul.f32 %v69, %v224
  %v294 = vmul.f32 %v70, %v229
  %v295 = vmul.f32 %v71, %v234
  %v296 = vmul.f32 %v72, %v239
  %v297 = vmul.f32 %v73, %v244
  %v298 = vmul.f32 %v74, %v249
  %v299 = vmul.f32 %v75, %v254
  %v300 = vmul.f32 %v76, %v259
  %v301 = vmul.f32 %v77, %v264
  %v302 = vmul.f32 %v78, %v269
  %v303 = vpack.c.bf16 %v272, %v271
  %v304 = vpack.c.bf16 %v274, %v273
  %v305 = vpack.c.bf16 %v276, %v275
  %v306 = vpack.c.bf16 %v278, %v277
  %v307 = vpack.c.bf16 %v280, %v279
  %v308 = vpack.c.bf16 %v282, %v281
  %v309 = vpack.c.bf16 %v284, %v283
  %v310 = vpack.c.bf16 %v286, %v285
  %v311 = vpack.c.bf16 %v288, %v287
  %v312 = vpack.c.bf16 %v290, %v289
  %v313 = vpack.c.bf16 %v292, %v291
  %v314 = vpack.c.bf16 %v294, %v293
  %v315 = vpack.c.bf16 %v296, %v295
  %v316 = vpack.c.bf16 %v298, %v297
  %v317 = vpack.c.bf16 %v300, %v299
  %v318 = vpack.c.bf16 %v302, %v301
  %v319 = vld [vmem:[%s2] sm:$0xf]
  %v320 = vld [vmem:[%s2 + $0x4] sm:$0xf]
  %v321 = vld [vmem:[%s2 + $0x8] sm:$0xf]
  %v322 = vld [vmem:[%s2 + $0xc] sm:$0xf]
  %v323 = vld [vmem:[%s2 + $0x10] sm:$0xf]
  %v324 = vld [vmem:[%s2 + $0x14] sm:$0xf]
  %v325 = vld [vmem:[%s2 + $0x18] sm:$0xf]
  %v326 = vld [vmem:[%s2 + $0x1c] sm:$0xf]
  %v327 = vld [vmem:[%s2 + $0x20] sm:$0xf]
  %v328 = vld [vmem:[%s2 + $0x24] sm:$0xf]
  %v329 = vld [vmem:[%s2 + $0x28] sm:$0xf]
  %v330 = vld [vmem:[%s2 + $0x2c] sm:$0xf]
  %v331 = vld [vmem:[%s2 + $0x30] sm:$0xf]
  %v332 = vld [vmem:[%s2 + $0x34] sm:$0xf]
  %v333 = vld [vmem:[%s2 + $0x38] sm:$0xf]
  %v334 = vld [vmem:[%s2 + $0x3c] sm:$0xf]
  %v351 = vunpack.c.l.b16 %v319
  %v352 = vunpack.c.l.b16 %v320
  %v353 = vunpack.c.l.b16 %v321
  %v354 = vunpack.c.l.b16 %v322
  %v355 = vunpack.c.l.b16 %v323
  %v356 = vunpack.c.l.b16 %v324
  %v357 = vunpack.c.l.b16 %v325
  %v358 = vunpack.c.l.b16 %v326
  %v359 = vunpack.c.l.b16 %v327
  %v360 = vunpack.c.l.b16 %v328
  %v361 = vunpack.c.l.b16 %v329
  %v362 = vunpack.c.l.b16 %v330
  %v363 = vunpack.c.l.b16 %v331
  %v364 = vunpack.c.l.b16 %v332
  %v365 = vunpack.c.l.b16 %v333
  %v366 = vunpack.c.l.b16 %v334
  %v367 = vpack.c.b16 %v352, %v351
  %v368 = vpack.c.b16 %v354, %v353
  %v369 = vpack.c.b16 %v356, %v355
  %v370 = vpack.c.b16 %v358, %v357
  %v371 = vpack.c.b16 %v360, %v359
  %v372 = vpack.c.b16 %v362, %v361
  %v373 = vpack.c.b16 %v364, %v363
  %v374 = vpack.c.b16 %v366, %v365
  %383 = vmatprep.subr.bf16.mxu0 0
  %384 = vmatpush1.bf16.msra.mxu0 %v367
  %385 = vmatprep.subr.bf16.mxu0 0
  %386 = vmatpush1.bf16.msra.mxu0 %v368
  %387 = vmatprep.subr.bf16.mxu0 0
  %388 = vmatpush1.bf16.msra.mxu0 %v369
  %389 = vmatprep.subr.bf16.mxu0 0
  %390 = vmatpush1.bf16.msra.mxu0 %v370
  %391 = vmatprep.subr.bf16.mxu0 0
  %392 = vmatpush1.bf16.msra.mxu0 %v371
  %393 = vmatprep.subr.bf16.mxu0 0
  %394 = vmatpush1.bf16.msra.mxu0 %v372
  %395 = vmatprep.subr.bf16.mxu0 0
  %396 = vmatpush1.bf16.msra.mxu0 %v373
  %397 = vmatprep.subr.bf16.mxu0 0
  %398 = vmatpush1.bf16.msra.mxu0 %v374
  %399 = vmatprep.subr.bf16.mxu0 0
  %400 = vmatpush1.bf16.msra.mxu0 0
  %401 = vmatprep.subr.bf16.mxu0 0
  %402 = vmatpush1.bf16.msra.mxu0 0
  %403 = vmatprep.subr.bf16.mxu0 0
  %404 = vmatpush1.bf16.msra.mxu0 0
  %405 = vmatprep.subr.bf16.mxu0 0
  %406 = vmatpush1.bf16.msra.mxu0 0
  %407 = vmatprep.subr.bf16.mxu0 0
  %408 = vmatpush1.bf16.msra.mxu0 0
  %409 = vmatprep.subr.bf16.mxu0 0
  %410 = vmatpush1.bf16.msra.mxu0 0
  %411 = vmatprep.subr.bf16.mxu0 0
  %412 = vmatpush1.bf16.msra.mxu0 0
  %413 = vmatprep.subr.bf16.mxu0 0
  %414 = vmatpush1.bf16.msra.mxu0 0
  %415 = vmatprep.mubr.bf16.mxu0 0
  %416 = vmatmul.mubr.bf16.gmra.mrb[0].mxu0 %v303
  %v417 = vpop.f32.mrb[0].mxu0
  %v418 = vadd.f32 0.0, %v417
  %v419 = vpop.f32.mrb[0].mxu0
  %v420 = vpop.f32.mrb[0].mxu0
  %v421 = vadd.f32 0.0, %v420
  %v422 = vpop.f32.mrb[0].mxu0
  %423 = vmatprep.mubr.bf16.mxu0 0
  %424 = vmatmul.mubr.bf16.gmra.mrb[0].mxu0 %v304
  %v425 = vpop.f32.mrb[0].mxu0
  %v426 = vadd.f32 0.0, %v425
  %v427 = vpop.f32.mrb[0].mxu0
  %v428 = vpop.f32.mrb[0].mxu0
  %v429 = vadd.f32 0.0, %v428
  %v430 = vpop.f32.mrb[0].mxu0
  %431 = vmatprep.mubr.bf16.mxu0 0
  %432 = vmatmul.mubr.bf16.gmra.mrb[0].mxu0 %v305
  %v433 = vpop.f32.mrb[0].mxu0
  %v434 = vadd.f32 0.0, %v433
  %v435 = vpop.f32.mrb[0].mxu0
  %v436 = vpop.f32.mrb[0].mxu0
  %v437 = vadd.f32 0.0, %v436
  %v438 = vpop.f32.mrb[0].mxu0
  %439 = vmatprep.mubr.bf16.mxu0 0
  %440 = vmatmul.mubr.bf16.gmra.mrb[0].mxu0 %v306
  %v441 = vpop.f32.mrb[0].mxu0
  %v442 = vadd.f32 0.0, %v441
  %v443 = vpop.f32.mrb[0].mxu0
  %v444 = vpop.f32.mrb[0].mxu0
  %v445 = vadd.f32 0.0, %v444
  %v446 = vpop.f32.mrb[0].mxu0
  %447 = vmatprep.mubr.bf16.mxu0 0
  %448 = vmatmul.mubr.bf16.gmra.mrb[0].mxu0 %v307
  %v449 = vpop.f32.mrb[0].mxu0
  %v450 = vadd.f32 0.0, %v449
  %v451 = vpop.f32.mrb[0].mxu0
  %v452 = vpop.f32.mrb[0].mxu0
  %v453 = vadd.f32 0.0, %v452
  %v454 = vpop.f32.mrb[0].mxu0
  %455 = vmatprep.mubr.bf16.mxu0 0
  %456 = vmatmul.mubr.bf16.gmra.mrb[0].mxu0 %v308
  %v457 = vpop.f32.mrb[0].mxu0
  %v458 = vadd.f32 0.0, %v457
  %v459 = vpop.f32.mrb[0].mxu0
  %v460 = vpop.f32.mrb[0].mxu0
  %v461 = vadd.f32 0.0, %v460
  %v462 = vpop.f32.mrb[0].mxu0
  %463 = vmatprep.mubr.bf16.mxu0 0
  %464 = vmatmul.mubr.bf16.gmra.mrb[0].mxu0 %v309
  %v465 = vpop.f32.mrb[0].mxu0
  %v466 = vadd.f32 0.0, %v465
  %v467 = vpop.f32.mrb[0].mxu0
  %v468 = vpop.f32.mrb[0].mxu0
  %v469 = vadd.f32 0.0, %v468
  %v470 = vpop.f32.mrb[0].mxu0
  %471 = vmatprep.mubr.bf16.mxu0 0
  %472 = vmatmul.mubr.bf16.gmra.mrb[0].mxu0 %v310
  %v473 = vpop.f32.mrb[0].mxu0
  %v474 = vadd.f32 0.0, %v473
  %v475 = vpop.f32.mrb[0].mxu0
  %v476 = vpop.f32.mrb[0].mxu0
  %v477 = vadd.f32 0.0, %v476
  %v478 = vpop.f32.mrb[0].mxu0
  %479 = vmatprep.mubr.bf16.mxu0 0
  %480 = vmatmul.mubr.bf16.gmra.mrb[0].mxu0 %v311
  %v481 = vpop.f32.mrb[0].mxu0
  %v482 = vadd.f32 0.0, %v481
  %v483 = vpop.f32.mrb[0].mxu0
  %v484 = vpop.f32.mrb[0].mxu0
  %v485 = vadd.f32 0.0, %v484
  %v486 = vpop.f32.mrb[0].mxu0
  %487 = vmatprep.mubr.bf16.mxu0 0
  %488 = vmatmul.mubr.bf16.gmra.mrb[0].mxu0 %v312
  %v489 = vpop.f32.mrb[0].mxu0
  %v490 = vadd.f32 0.0, %v489
  %v491 = vpop.f32.mrb[0].mxu0
  %v492 = vpop.f32.mrb[0].mxu0
  %v493 = vadd.f32 0.0, %v492
  %v494 = vpop.f32.mrb[0].mxu0
  %495 = vmatprep.mubr.bf16.mxu0 0
  %496 = vmatmul.mubr.bf16.gmra.mrb[0].mxu0 %v313
  %v497 = vpop.f32.mrb[0].mxu0
  %v498 = vadd.f32 0.0, %v497
  %v499 = vpop.f32.mrb[0].mxu0
  %v500 = vpop.f32.mrb[0].mxu0
  %v501 = vadd.f32 0.0, %v500
  %v502 = vpop.f32.mrb[0].mxu0
  %503 = vmatprep.mubr.bf16.mxu0 0
  %504 = vmatmul.mubr.bf16.gmra.mrb[0].mxu0 %v314
  %v505 = vpop.f32.mrb[0].mxu0
  %v506 = vadd.f32 0.0, %v505
  %v507 = vpop.f32.mrb[0].mxu0
  %v508 = vpop.f32.mrb[0].mxu0
  %v509 = vadd.f32 0.0, %v508
  %v510 = vpop.f32.mrb[0].mxu0
  %511 = vmatprep.mubr.bf16.mxu0 0
  %512 = vmatmul.mubr.bf16.gmra.mrb[0].mxu0 %v315
  %v513 = vpop.f32.mrb[0].mxu0
  %v514 = vadd.f32 0.0, %v513
  %v515 = vpop.f32.mrb[0].mxu0
  %v516 = vpop.f32.mrb[0].mxu0
  %v517 = vadd.f32 0.0, %v516
  %v518 = vpop.f32.mrb[0].mxu0
  %519 = vmatprep.mubr.bf16.mxu0 0
  %520 = vmatmul.mubr.bf16.gmra.mrb[0].mxu0 %v316
  %v521 = vpop.f32.mrb[0].mxu0
  %v522 = vadd.f32 0.0, %v521
  %v523 = vpop.f32.mrb[0].mxu0
  %v524 = vpop.f32.mrb[0].mxu0
  %v525 = vadd.f32 0.0, %v524
  %v526 = vpop.f32.mrb[0].mxu0
  %527 = vmatprep.mubr.bf16.mxu0 0
  %528 = vmatmul.mubr.bf16.gmra.mrb[0].mxu0 %v317
  %v529 = vpop.f32.mrb[0].mxu0
  %v530 = vadd.f32 0.0, %v529
  %v531 = vpop.f32.mrb[0].mxu0
  %v532 = vpop.f32.mrb[0].mxu0
  %v533 = vadd.f32 0.0, %v532
  %v534 = vpop.f32.mrb[0].mxu0
  %535 = vmatprep.mubr.bf16.mxu0 0
  %536 = vmatmul.mubr.bf16.gmra.mrb[0].mxu0 %v318
  %v537 = vpop.f32.mrb[0].mxu0
  %v538 = vadd.f32 0.0, %v537
  %v539 = vpop.f32.mrb[0].mxu0
  %v540 = vpop.f32.mrb[0].mxu0
  %v541 = vadd.f32 0.0, %v540
  %v542 = vpop.f32.mrb[0].mxu0
  %543 = vdwg.mxu0
  %v544 = vpack.c.bf16 %v421, %v418
  %v545 = vpack.c.bf16 %v429, %v426
  %v546 = vpack.c.bf16 %v437, %v434
  %v547 = vpack.c.bf16 %v445, %v442
  %v548 = vpack.c.bf16 %v453, %v450
  %v549 = vpack.c.bf16 %v461, %v458
  %v550 = vpack.c.bf16 %v469, %v466
  %v551 = vpack.c.bf16 %v477, %v474
  %v552 = vpack.c.bf16 %v485, %v482
  %v553 = vpack.c.bf16 %v493, %v490
  %v554 = vpack.c.bf16 %v501, %v498
  %v555 = vpack.c.bf16 %v509, %v506
  %v556 = vpack.c.bf16 %v517, %v514
  %v557 = vpack.c.bf16 %v525, %v522
  %v558 = vpack.c.bf16 %v533, %v530
  %v559 = vpack.c.bf16 %v541, %v538
  %v576 = vunpack.c.l.b16 %v544
  %v577 = vunpack.c.h.b16 %v544
  %v578 = vunpack.c.l.b16 %v545
  %v579 = vunpack.c.h.b16 %v545
  %v580 = vunpack.c.l.b16 %v546
  %v581 = vunpack.c.h.b16 %v546
  %v582 = vunpack.c.l.b16 %v547
  %v583 = vunpack.c.h.b16 %v547
  %v584 = vunpack.c.l.b16 %v548
  %v585 = vunpack.c.h.b16 %v548
  %v586 = vunpack.c.l.b16 %v549
  %v587 = vunpack.c.h.b16 %v549
  %v588 = vunpack.c.l.b16 %v550
  %v589 = vunpack.c.h.b16 %v550
  %v590 = vunpack.c.l.b16 %v551
  %v591 = vunpack.c.h.b16 %v551
  %v592 = vunpack.c.l.b16 %v552
  %v593 = vunpack.c.h.b16 %v552
  %v594 = vunpack.c.l.b16 %v553
  %v595 = vunpack.c.h.b16 %v553
  %v596 = vunpack.c.l.b16 %v554
  %v597 = vunpack.c.h.b16 %v554
  %v598 = vunpack.c.l.b16 %v555
  %v599 = vunpack.c.h.b16 %v555
  %v600 = vunpack.c.l.b16 %v556
  %v601 = vunpack.c.h.b16 %v556
  %v602 = vunpack.c.l.b16 %v557
  %v603 = vunpack.c.h.b16 %v557
  %v604 = vunpack.c.l.b16 %v558
  %v605 = vunpack.c.h.b16 %v558
  %v606 = vunpack.c.l.b16 %v559
  %v607 = vunpack.c.h.b16 %v559
  %v608 = vpack.c.b16 %v576, %v576
  %v609 = vpack.c.b16 %v577, %v577
  %v610 = vpack.c.b16 %v578, %v578
  %v611 = vpack.c.b16 %v579, %v579
  %v612 = vpack.c.b16 %v580, %v580
  %v613 = vpack.c.b16 %v581, %v581
  %v614 = vpack.c.b16 %v582, %v582
  %v615 = vpack.c.b16 %v583, %v583
  %v616 = vpack.c.b16 %v584, %v584
  %v617 = vpack.c.b16 %v585, %v585
  %v618 = vpack.c.b16 %v586, %v586
  %v619 = vpack.c.b16 %v587, %v587
  %v620 = vpack.c.b16 %v588, %v588
  %v621 = vpack.c.b16 %v589, %v589
  %v622 = vpack.c.b16 %v590, %v590
  %v623 = vpack.c.b16 %v591, %v591
  %v624 = vpack.c.b16 %v592, %v592
  %v625 = vpack.c.b16 %v593, %v593
  %v626 = vpack.c.b16 %v594, %v594
  %v627 = vpack.c.b16 %v595, %v595
  %v628 = vpack.c.b16 %v596, %v596
  %v629 = vpack.c.b16 %v597, %v597
  %v630 = vpack.c.b16 %v598, %v598
  %v631 = vpack.c.b16 %v599, %v599
  %v632 = vpack.c.b16 %v600, %v600
  %v633 = vpack.c.b16 %v601, %v601
  %v634 = vpack.c.b16 %v602, %v602
  %v635 = vpack.c.b16 %v603, %v603
  %v636 = vpack.c.b16 %v604, %v604
  %v637 = vpack.c.b16 %v605, %v605
  %v638 = vpack.c.b16 %v606, %v606
  %v639 = vpack.c.b16 %v607, %v607
  %672 = vst [vmem:[%s3] sm:$0xf] %v608
  %673 = vst [vmem:[%s3 + $0x4] sm:$0xf] %v609
  %674 = vst [vmem:[%s3 + $0x8] sm:$0xf] %v610
  %675 = vst [vmem:[%s3 + $0xc] sm:$0xf] %v611
  %676 = vst [vmem:[%s3 + $0x10] sm:$0xf] %v612
  %677 = vst [vmem:[%s3 + $0x14] sm:$0xf] %v613
  %678 = vst [vmem:[%s3 + $0x18] sm:$0xf] %v614
  %679 = vst [vmem:[%s3 + $0x1c] sm:$0xf] %v615
  %680 = vst [vmem:[%s3 + $0x20] sm:$0xf] %v616
  %681 = vst [vmem:[%s3 + $0x24] sm:$0xf] %v617
  %682 = vst [vmem:[%s3 + $0x28] sm:$0xf] %v618
  %683 = vst [vmem:[%s3 + $0x2c] sm:$0xf] %v619
  %684 = vst [vmem:[%s3 + $0x30] sm:$0xf] %v620
  %685 = vst [vmem:[%s3 + $0x34] sm:$0xf] %v621
  %686 = vst [vmem:[%s3 + $0x38] sm:$0xf] %v622
  %687 = vst [vmem:[%s3 + $0x3c] sm:$0xf] %v623
  %688 = vst [vmem:[%s3 + $0x40] sm:$0xf] %v624
  %689 = vst [vmem:[%s3 + $0x44] sm:$0xf] %v625
  %690 = vst [vmem:[%s3 + $0x48] sm:$0xf] %v626
  %691 = vst [vmem:[%s3 + $0x4c] sm:$0xf] %v627
  %692 = vst [vmem:[%s3 + $0x50] sm:$0xf] %v628
  %693 = vst [vmem:[%s3 + $0x54] sm:$0xf] %v629
  %694 = vst [vmem:[%s3 + $0x58] sm:$0xf] %v630
  %695 = vst [vmem:[%s3 + $0x5c] sm:$0xf] %v631
  %696 = vst [vmem:[%s3 + $0x60] sm:$0xf] %v632
  %697 = vst [vmem:[%s3 + $0x64] sm:$0xf] %v633
  %698 = vst [vmem:[%s3 + $0x68] sm:$0xf] %v634
  %699 = vst [vmem:[%s3 + $0x6c] sm:$0xf] %v635
  %700 = vst [vmem:[%s3 + $0x70] sm:$0xf] %v636
  %701 = vst [vmem:[%s3 + $0x74] sm:$0xf] %v637
  %702 = vst [vmem:[%s3 + $0x78] sm:$0xf] %v638
  %703 = vst [vmem:[%s3 + $0x7c] sm:$0xf] %v639
  // Predicated region
  $region14: #{gcn_multilayers_forward.4} parent=0 // pred_check
    _
  $region15: #{gcn_multilayers_forward.4} parent=0 // pred_check_branch
    %705 = sbr.rel (0) target = $region17
  $region16: #{gcn_multilayers_forward.4} parent=0 // pred_region
    _
  $region17: #{gcn_multilayers_forward.4} parent=0 // pred_fallthru
    _
  // Predicated region
  $region18: #{gcn_multilayers_forward.4} parent=0 // pred_check
    _
  $region19: #{gcn_multilayers_forward.4} parent=0 // pred_check_branch
    %707 = sbr.rel (0) target = $region21
  $region20: #{gcn_multilayers_forward.4} parent=0 // pred_region
    _
  $region21: #{gcn_multilayers_forward.4} parent=0 // pred_fallthru
    _

// kernel: gcn_multilayers_forward.7
$region0: #{gcn_multilayers_forward.7}
  #allocation0 [shape = 'u32[]', space=smem, size = 0x4, offset = 0x4, fixed_abs, tag = 'smem constant byte address 0x4 - core index']
  #allocation1 [shape = 'u32[144,128]{1,0:T(1,128)}', space=vmem, size = 0x12000, scoped, tag = 'internal scratch']
  #allocation2 [shape = 'f32[256,128]{1,0:T(8,128)}', space=vmem, size = 0x20000, scoped, tag = 'scratch operand']
  %s0 = inlined_call_operand.vmem [shape: bf16[256,256], index: 0, kind: input, shape index: {}]
  %s1 = inlined_call_operand.vmem [shape: bf16[256,128], index: 1, kind: input, shape index: {}]
  %s2 = inlined_call_operand.vmem [shape: f32[256,1], index: 2, kind: input, shape index: {}]
  %s3 = inlined_call_operand.vmem [shape: f32[1,128], index: 3, kind: input, shape index: {}]
  %s4 = inlined_call_operand.vmem [shape: f32[256,128], index: 4, kind: output, shape index: {}]
  %s5 = sld [smem:[#allocation0]]
  $region34: #{gcn_multilayers_forward.7} parent=0
    _
  %s7 = ssub.s32 1, %s5
  %s8 = scalar_select 0, %s7, %s5
  // Predicated region
  $region2: #{gcn_multilayers_forward.7} parent=0 // pred_check
    _
  $region3: #{gcn_multilayers_forward.7} parent=0 // pred_check_branch
    %10 = sbr.rel (0) target = $region5
  $region4: #{gcn_multilayers_forward.7} parent=0 // pred_region
    _
  $region5: #{gcn_multilayers_forward.7} parent=0 // pred_fallthru
    _
  // Predicated region
  $region6: #{gcn_multilayers_forward.7} parent=0 // pred_check
    _
  $region7: #{gcn_multilayers_forward.7} parent=0 // pred_check_branch
    %12 = sbr.rel (0) target = $region9
  $region8: #{gcn_multilayers_forward.7} parent=0 // pred_region
    _
  $region9: #{gcn_multilayers_forward.7} parent=0 // pred_fallthru
    _
  // Predicated region
  $region10: #{gcn_multilayers_forward.7} parent=0 // pred_check
    _
  $region11: #{gcn_multilayers_forward.7} parent=0 // pred_check_branch
    %14 = sbr.rel (0) target = $region13
  $region12: #{gcn_multilayers_forward.7} parent=0 // pred_region
    _
  $region13: #{gcn_multilayers_forward.7} parent=0 // pred_fallthru
    _
  // Predicated region
  $region14: #{gcn_multilayers_forward.7} parent=0 // pred_check
    _
  $region15: #{gcn_multilayers_forward.7} parent=0 // pred_check_branch
    %16 = sbr.rel (0) target = $region17
  $region16: #{gcn_multilayers_forward.7} parent=0 // pred_region
    _
  $region17: #{gcn_multilayers_forward.7} parent=0 // pred_fallthru
    _
  %p18 = scmp.eq.s32.totalorder 0, 0
  // Predicated region
  $region18: #{gcn_multilayers_forward.7} parent=0 // pred_check
    %p19 = pneg %p18
  $region19: #{gcn_multilayers_forward.7} parent=0 // pred_check_branch
    %21 = sbr.rel (%p19) target = $region21
  $region20: #{gcn_multilayers_forward.7} parent=0 // pred_region
    %22 = vst [vmem:[#allocation2] sm:$0xff] 0.0
    %23 = vst [vmem:[#allocation2 + $0x8] sm:$0xff] 0.0
    %24 = vst [vmem:[#allocation2 + $0x10] sm:$0xff] 0.0
    %25 = vst [vmem:[#allocation2 + $0x18] sm:$0xff] 0.0
    %26 = vst [vmem:[#allocation2 + $0x20] sm:$0xff] 0.0
    %27 = vst [vmem:[#allocation2 + $0x28] sm:$0xff] 0.0
    %28 = vst [vmem:[#allocation2 + $0x30] sm:$0xff] 0.0
    %29 = vst [vmem:[#allocation2 + $0x38] sm:$0xff] 0.0
    %30 = vst [vmem:[#allocation2 + $0x40] sm:$0xff] 0.0
    %31 = vst [vmem:[#allocation2 + $0x48] sm:$0xff] 0.0
    %32 = vst [vmem:[#allocation2 + $0x50] sm:$0xff] 0.0
    %33 = vst [vmem:[#allocation2 + $0x58] sm:$0xff] 0.0
    %34 = vst [vmem:[#allocation2 + $0x60] sm:$0xff] 0.0
    %35 = vst [vmem:[#allocation2 + $0x68] sm:$0xff] 0.0
    %36 = vst [vmem:[#allocation2 + $0x70] sm:$0xff] 0.0
    %37 = vst [vmem:[#allocation2 + $0x78] sm:$0xff] 0.0
    %38 = vst [vmem:[#allocation2 + $0x80] sm:$0xff] 0.0
    %39 = vst [vmem:[#allocation2 + $0x88] sm:$0xff] 0.0
    %40 = vst [vmem:[#allocation2 + $0x90] sm:$0xff] 0.0
    %41 = vst [vmem:[#allocation2 + $0x98] sm:$0xff] 0.0
    %42 = vst [vmem:[#allocation2 + $0xa0] sm:$0xff] 0.0
    %43 = vst [vmem:[#allocation2 + $0xa8] sm:$0xff] 0.0
    %44 = vst [vmem:[#allocation2 + $0xb0] sm:$0xff] 0.0
    %45 = vst [vmem:[#allocation2 + $0xb8] sm:$0xff] 0.0
    %46 = vst [vmem:[#allocation2 + $0xc0] sm:$0xff] 0.0
    %47 = vst [vmem:[#allocation2 + $0xc8] sm:$0xff] 0.0
    %48 = vst [vmem:[#allocation2 + $0xd0] sm:$0xff] 0.0
    %49 = vst [vmem:[#allocation2 + $0xd8] sm:$0xff] 0.0
    %50 = vst [vmem:[#allocation2 + $0xe0] sm:$0xff] 0.0
    %51 = vst [vmem:[#allocation2 + $0xe8] sm:$0xff] 0.0
    %52 = vst [vmem:[#allocation2 + $0xf0] sm:$0xff] 0.0
    %53 = vst [vmem:[#allocation2 + $0xf8] sm:$0xff] 0.0
  $region21: #{gcn_multilayers_forward.7} parent=0 // pred_fallthru
    _
  %s54 = smul.u32 0, 256
  %s55 = sshra.s32 %s54, 3
  %s56 = sand.u32 %s54, 7
  %s57 = smul.addr %s55, 4
  %s58 = scalar_lea.vmem %s1, %s57
  %v59 = vld [vmem:[%s58] sm:$0xf]
  %v60 = vld [vmem:[%s58 + $0x4] sm:$0xf]
  %v61 = vld [vmem:[%s58 + $0x8] sm:$0xf]
  %v62 = vld [vmem:[%s58 + $0xc] sm:$0xf]
  %v63 = vld [vmem:[%s58 + $0x10] sm:$0xf]
  %v64 = vld [vmem:[%s58 + $0x14] sm:$0xf]
  %v65 = vld [vmem:[%s58 + $0x18] sm:$0xf]
  %v66 = vld [vmem:[%s58 + $0x1c] sm:$0xf]
  %v67 = vld [vmem:[%s58 + $0x20] sm:$0xf]
  %v68 = vld [vmem:[%s58 + $0x24] sm:$0xf]
  %v69 = vld [vmem:[%s58 + $0x28] sm:$0xf]
  %v70 = vld [vmem:[%s58 + $0x2c] sm:$0xf]
  %v71 = vld [vmem:[%s58 + $0x30] sm:$0xf]
  %v72 = vld [vmem:[%s58 + $0x34] sm:$0xf]
  %v73 = vld [vmem:[%s58 + $0x38] sm:$0xf]
  %v74 = vld [vmem:[%s58 + $0x3c] sm:$0xf]
  %v75 = vld [vmem:[%s58 + $0x40] sm:$0xf]
  %v76 = vld [vmem:[%s58 + $0x44] sm:$0xf]
  %v77 = vld [vmem:[%s58 + $0x48] sm:$0xf]
  %v78 = vld [vmem:[%s58 + $0x4c] sm:$0xf]
  %v79 = vld [vmem:[%s58 + $0x50] sm:$0xf]
  %v80 = vld [vmem:[%s58 + $0x54] sm:$0xf]
  %v81 = vld [vmem:[%s58 + $0x58] sm:$0xf]
  %v82 = vld [vmem:[%s58 + $0x5c] sm:$0xf]
  %v83 = vld [vmem:[%s58 + $0x60] sm:$0xf]
  %v84 = vld [vmem:[%s58 + $0x64] sm:$0xf]
  %v85 = vld [vmem:[%s58 + $0x68] sm:$0xf]
  %v86 = vld [vmem:[%s58 + $0x6c] sm:$0xf]
  %v87 = vld [vmem:[%s58 + $0x70] sm:$0xf]
  %v88 = vld [vmem:[%s58 + $0x74] sm:$0xf]
  %v89 = vld [vmem:[%s58 + $0x78] sm:$0xf]
  %v90 = vld [vmem:[%s58 + $0x7c] sm:$0xf]
  %v91 = vld [vmem:[#allocation2] sm:$0xff]
  %v92 = vld [vmem:[#allocation2 + $0x8] sm:$0xff]
  %v93 = vld [vmem:[#allocation2 + $0x10] sm:$0xff]
  %v94 = vld [vmem:[#allocation2 + $0x18] sm:$0xff]
  %v95 = vld [vmem:[#allocation2 + $0x20] sm:$0xff]
  %v96 = vld [vmem:[#allocation2 + $0x28] sm:$0xff]
  %v97 = vld [vmem:[#allocation2 + $0x30] sm:$0xff]
  %v98 = vld [vmem:[#allocation2 + $0x38] sm:$0xff]
  %v99 = vld [vmem:[#allocation2 + $0x40] sm:$0xff]
  %v100 = vld [vmem:[#allocation2 + $0x48] sm:$0xff]
  %v101 = vld [vmem:[#allocation2 + $0x50] sm:$0xff]
  %v102 = vld [vmem:[#allocation2 + $0x58] sm:$0xff]
  %v103 = vld [vmem:[#allocation2 + $0x60] sm:$0xff]
  %v104 = vld [vmem:[#allocation2 + $0x68] sm:$0xff]
  %v105 = vld [vmem:[#allocation2 + $0x70] sm:$0xff]
  %v106 = vld [vmem:[#allocation2 + $0x78] sm:$0xff]
  %v107 = vld [vmem:[#allocation2 + $0x80] sm:$0xff]
  %v108 = vld [vmem:[#allocation2 + $0x88] sm:$0xff]
  %v109 = vld [vmem:[#allocation2 + $0x90] sm:$0xff]
  %v110 = vld [vmem:[#allocation2 + $0x98] sm:$0xff]
  %v111 = vld [vmem:[#allocation2 + $0xa0] sm:$0xff]
  %v112 = vld [vmem:[#allocation2 + $0xa8] sm:$0xff]
  %v113 = vld [vmem:[#allocation2 + $0xb0] sm:$0xff]
  %v114 = vld [vmem:[#allocation2 + $0xb8] sm:$0xff]
  %v115 = vld [vmem:[#allocation2 + $0xc0] sm:$0xff]
  %v116 = vld [vmem:[#allocation2 + $0xc8] sm:$0xff]
  %v117 = vld [vmem:[#allocation2 + $0xd0] sm:$0xff]
  %v118 = vld [vmem:[#allocation2 + $0xd8] sm:$0xff]
  %v119 = vld [vmem:[#allocation2 + $0xe0] sm:$0xff]
  %v120 = vld [vmem:[#allocation2 + $0xe8] sm:$0xff]
  %v121 = vld [vmem:[#allocation2 + $0xf0] sm:$0xff]
  %v122 = vld [vmem:[#allocation2 + $0xf8] sm:$0xff]
  %v123 = vld [vmem:[%s0] sm:$0xff]
  %v124 = vld [vmem:[%s0 + $0x8] sm:$0xff]
  %v125 = vld [vmem:[%s0 + $0x10] sm:$0xff]
  %v126 = vld [vmem:[%s0 + $0x18] sm:$0xff]
  %v127 = vld [vmem:[%s0 + $0x20] sm:$0xff]
  %v128 = vld [vmem:[%s0 + $0x28] sm:$0xff]
  %v129 = vld [vmem:[%s0 + $0x30] sm:$0xff]
  %v130 = vld [vmem:[%s0 + $0x38] sm:$0xff]
  %v131 = vld [vmem:[%s0 + $0x40] sm:$0xff]
  %v132 = vld [vmem:[%s0 + $0x48] sm:$0xff]
  %v133 = vld [vmem:[%s0 + $0x50] sm:$0xff]
  %v134 = vld [vmem:[%s0 + $0x58] sm:$0xff]
  %v135 = vld [vmem:[%s0 + $0x60] sm:$0xff]
  %v136 = vld [vmem:[%s0 + $0x68] sm:$0xff]
  %v137 = vld [vmem:[%s0 + $0x70] sm:$0xff]
  %v138 = vld [vmem:[%s0 + $0x78] sm:$0xff]
  %v139 = vld [vmem:[%s0 + $0x80] sm:$0xff]
  %v140 = vld [vmem:[%s0 + $0x88] sm:$0xff]
  %v141 = vld [vmem:[%s0 + $0x90] sm:$0xff]
  %v142 = vld [vmem:[%s0 + $0x98] sm:$0xff]
  %v143 = vld [vmem:[%s0 + $0xa0] sm:$0xff]
  %v144 = vld [vmem:[%s0 + $0xa8] sm:$0xff]
  %v145 = vld [vmem:[%s0 + $0xb0] sm:$0xff]
  %v146 = vld [vmem:[%s0 + $0xb8] sm:$0xff]
  %v147 = vld [vmem:[%s0 + $0xc0] sm:$0xff]
  %v148 = vld [vmem:[%s0 + $0xc8] sm:$0xff]
  %v149 = vld [vmem:[%s0 + $0xd0] sm:$0xff]
  %v150 = vld [vmem:[%s0 + $0xd8] sm:$0xff]
  %v151 = vld [vmem:[%s0 + $0xe0] sm:$0xff]
  %v152 = vld [vmem:[%s0 + $0xe8] sm:$0xff]
  %v153 = vld [vmem:[%s0 + $0xf0] sm:$0xff]
  %v154 = vld [vmem:[%s0 + $0xf8] sm:$0xff]
  %v187 = vunpack.c.l.b16 %v123
  %v188 = vunpack.c.h.b16 %v123
  %v189 = vunpack.c.l.b16 %v124
  %v190 = vunpack.c.h.b16 %v124
  %v191 = vunpack.c.l.b16 %v125
  %v192 = vunpack.c.h.b16 %v125
  %v193 = vunpack.c.l.b16 %v126
  %v194 = vunpack.c.h.b16 %v126
  %v195 = vunpack.c.l.b16 %v127
  %v196 = vunpack.c.h.b16 %v127
  %v197 = vunpack.c.l.b16 %v128
  %v198 = vunpack.c.h.b16 %v128
  %v199 = vunpack.c.l.b16 %v129
  %v200 = vunpack.c.h.b16 %v129
  %v201 = vunpack.c.l.b16 %v130
  %v202 = vunpack.c.h.b16 %v130
  %v203 = vunpack.c.l.b16 %v131
  %v204 = vunpack.c.h.b16 %v131
  %v205 = vunpack.c.l.b16 %v132
  %v206 = vunpack.c.h.b16 %v132
  %v207 = vunpack.c.l.b16 %v133
  %v208 = vunpack.c.h.b16 %v133
  %v209 = vunpack.c.l.b16 %v134
  %v210 = vunpack.c.h.b16 %v134
  %v211 = vunpack.c.l.b16 %v135
  %v212 = vunpack.c.h.b16 %v135
  %v213 = vunpack.c.l.b16 %v136
  %v214 = vunpack.c.h.b16 %v136
  %v215 = vunpack.c.l.b16 %v137
  %v216 = vunpack.c.h.b16 %v137
  %v217 = vunpack.c.l.b16 %v138
  %v218 = vunpack.c.h.b16 %v138
  %v219 = vunpack.c.l.b16 %v139
  %v220 = vunpack.c.h.b16 %v139
  %v221 = vunpack.c.l.b16 %v140
  %v222 = vunpack.c.h.b16 %v140
  %v223 = vunpack.c.l.b16 %v141
  %v224 = vunpack.c.h.b16 %v141
  %v225 = vunpack.c.l.b16 %v142
  %v226 = vunpack.c.h.b16 %v142
  %v227 = vunpack.c.l.b16 %v143
  %v228 = vunpack.c.h.b16 %v143
  %v229 = vunpack.c.l.b16 %v144
  %v230 = vunpack.c.h.b16 %v144
  %v231 = vunpack.c.l.b16 %v145
  %v232 = vunpack.c.h.b16 %v145
  %v233 = vunpack.c.l.b16 %v146
  %v234 = vunpack.c.h.b16 %v146
  %v235 = vunpack.c.l.b16 %v147
  %v236 = vunpack.c.h.b16 %v147
  %v237 = vunpack.c.l.b16 %v148
  %v238 = vunpack.c.h.b16 %v148
  %v239 = vunpack.c.l.b16 %v149
  %v240 = vunpack.c.h.b16 %v149
  %v241 = vunpack.c.l.b16 %v150
  %v242 = vunpack.c.h.b16 %v150
  %v243 = vunpack.c.l.b16 %v151
  %v244 = vunpack.c.h.b16 %v151
  %v245 = vunpack.c.l.b16 %v152
  %v246 = vunpack.c.h.b16 %v152
  %v247 = vunpack.c.l.b16 %v153
  %v248 = vunpack.c.h.b16 %v153
  %v249 = vunpack.c.l.b16 %v154
  %v250 = vunpack.c.h.b16 %v154
  %v251 = vpack.c.b16 %v189, %v187
  %v252 = vpack.c.b16 %v190, %v188
  %v253 = vpack.c.b16 %v193, %v191
  %v254 = vpack.c.b16 %v194, %v192
  %v255 = vpack.c.b16 %v197, %v195
  %v256 = vpack.c.b16 %v198, %v196
  %v257 = vpack.c.b16 %v201, %v199
  %v258 = vpack.c.b16 %v202, %v200
  %v259 = vpack.c.b16 %v205, %v203
  %v260 = vpack.c.b16 %v206, %v204
  %v261 = vpack.c.b16 %v209, %v207
  %v262 = vpack.c.b16 %v210, %v208
  %v263 = vpack.c.b16 %v213, %v211
  %v264 = vpack.c.b16 %v214, %v212
  %v265 = vpack.c.b16 %v217, %v215
  %v266 = vpack.c.b16 %v218, %v216
  %v267 = vpack.c.b16 %v221, %v219
  %v268 = vpack.c.b16 %v222, %v220
  %v269 = vpack.c.b16 %v225, %v223
  %v270 = vpack.c.b16 %v226, %v224
  %v271 = vpack.c.b16 %v229, %v227
  %v272 = vpack.c.b16 %v230, %v228
  %v273 = vpack.c.b16 %v233, %v231
  %v274 = vpack.c.b16 %v234, %v232
  %v275 = vpack.c.b16 %v237, %v235
  %v276 = vpack.c.b16 %v238, %v236
  %v277 = vpack.c.b16 %v241, %v239
  %v278 = vpack.c.b16 %v242, %v240
  %v279 = vpack.c.b16 %v245, %v243
  %v280 = vpack.c.b16 %v246, %v244
  %v281 = vpack.c.b16 %v249, %v247
  %v282 = vpack.c.b16 %v250, %v248
  %v347 = vunpack.c.l.b16 %v59
  %v348 = vunpack.c.l.b16 %v60
  %v349 = vunpack.c.l.b16 %v61
  %v350 = vunpack.c.l.b16 %v62
  %v351 = vunpack.c.l.b16 %v63
  %v352 = vunpack.c.l.b16 %v64
  %v353 = vunpack.c.l.b16 %v65
  %v354 = vunpack.c.l.b16 %v66
  %v355 = vunpack.c.l.b16 %v67
  %v356 = vunpack.c.l.b16 %v68
  %v357 = vunpack.c.l.b16 %v69
  %v358 = vunpack.c.l.b16 %v70
  %v359 = vunpack.c.l.b16 %v71
  %v360 = vunpack.c.l.b16 %v72
  %v361 = vunpack.c.l.b16 %v73
  %v362 = vunpack.c.l.b16 %v74
  %v363 = vunpack.c.l.b16 %v75
  %v364 = vunpack.c.l.b16 %v76
  %v365 = vunpack.c.l.b16 %v77
  %v366 = vunpack.c.l.b16 %v78
  %v367 = vunpack.c.l.b16 %v79
  %v368 = vunpack.c.l.b16 %v80
  %v369 = vunpack.c.l.b16 %v81
  %v370 = vunpack.c.l.b16 %v82
  %v371 = vunpack.c.l.b16 %v83
  %v372 = vunpack.c.l.b16 %v84
  %v373 = vunpack.c.l.b16 %v85
  %v374 = vunpack.c.l.b16 %v86
  %v375 = vunpack.c.l.b16 %v87
  %v376 = vunpack.c.l.b16 %v88
  %v377 = vunpack.c.l.b16 %v89
  %v378 = vunpack.c.l.b16 %v90
  %v379 = vpack.c.b16 %v348, %v347
  %v380 = vpack.c.b16 %v350, %v349
  %v381 = vpack.c.b16 %v352, %v351
  %v382 = vpack.c.b16 %v354, %v353
  %v383 = vpack.c.b16 %v356, %v355
  %v384 = vpack.c.b16 %v358, %v357
  %v385 = vpack.c.b16 %v360, %v359
  %v386 = vpack.c.b16 %v362, %v361
  %v387 = vpack.c.b16 %v364, %v363
  %v388 = vpack.c.b16 %v366, %v365
  %v389 = vpack.c.b16 %v368, %v367
  %v390 = vpack.c.b16 %v370, %v369
  %v391 = vpack.c.b16 %v372, %v371
  %v392 = vpack.c.b16 %v374, %v373
  %v393 = vpack.c.b16 %v376, %v375
  %v394 = vpack.c.b16 %v378, %v377
  %411 = vmatprep.subr.bf16.mxu0 0
  %412 = vmatpush1.bf16.msra.mxu0 %v379
  %413 = vmatprep.subr.bf16.mxu0 0
  %414 = vmatpush1.bf16.msra.mxu0 %v380
  %415 = vmatprep.subr.bf16.mxu0 0
  %416 = vmatpush1.bf16.msra.mxu0 %v381
  %417 = vmatprep.subr.bf16.mxu0 0
  %418 = vmatpush1.bf16.msra.mxu0 %v382
  %419 = vmatprep.subr.bf16.mxu0 0
  %420 = vmatpush1.bf16.msra.mxu0 %v383
  %421 = vmatprep.subr.bf16.mxu0 0
  %422 = vmatpush1.bf16.msra.mxu0 %v384
  %423 = vmatprep.subr.bf16.mxu0 0
  %424 = vmatpush1.bf16.msra.mxu0 %v385
  %425 = vmatprep.subr.bf16.mxu0 0
  %426 = vmatpush1.bf16.msra.mxu0 %v386
  %427 = vmatprep.subr.bf16.mxu0 0
  %428 = vmatpush1.bf16.msra.mxu0 %v387
  %429 = vmatprep.subr.bf16.mxu0 0
  %430 = vmatpush1.bf16.msra.mxu0 %v388
  %431 = vmatprep.subr.bf16.mxu0 0
  %432 = vmatpush1.bf16.msra.mxu0 %v389
  %433 = vmatprep.subr.bf16.mxu0 0
  %434 = vmatpush1.bf16.msra.mxu0 %v390
  %435 = vmatprep.subr.bf16.mxu0 0
  %436 = vmatpush1.bf16.msra.mxu0 %v391
  %437 = vmatprep.subr.bf16.mxu0 0
  %438 = vmatpush1.bf16.msra.mxu0 %v392
  %439 = vmatprep.subr.bf16.mxu0 0
  %440 = vmatpush1.bf16.msra.mxu0 %v393
  %441 = vmatprep.subr.bf16.mxu0 0
  %442 = vmatpush1.bf16.msra.mxu0 %v394
  %443 = vmatprep.mubr.bf16.mxu0 %v252
  %444 = vmatmul.mubr.bf16.gmra.mrb[0].mxu0 %v251
  %v445 = vpop.f32.mrb[0].mxu0
  %v446 = vadd.f32 0.0, %v445
  %v447 = vpop.f32.mrb[0].mxu0
  %v448 = vpop.f32.mrb[0].mxu0
  %v449 = vadd.f32 0.0, %v448
  %v450 = vpop.f32.mrb[0].mxu0
  %451 = vmatprep.mubr.bf16.mxu0 %v254
  %452 = vmatmul.mubr.bf16.gmra.mrb[0].mxu0 %v253
  %v453 = vpop.f32.mrb[0].mxu0
  %v454 = vadd.f32 0.0, %v453
  %v455 = vpop.f32.mrb[0].mxu0
  %v456 = vpop.f32.mrb[0].mxu0
  %v457 = vadd.f32 0.0, %v456
  %v458 = vpop.f32.mrb[0].mxu0
  %459 = vmatprep.mubr.bf16.mxu0 %v256
  %460 = vmatmul.mubr.bf16.gmra.mrb[0].mxu0 %v255
  %v461 = vpop.f32.mrb[0].mxu0
  %v462 = vadd.f32 0.0, %v461
  %v463 = vpop.f32.mrb[0].mxu0
  %v464 = vpop.f32.mrb[0].mxu0
  %v465 = vadd.f32 0.0, %v464
  %v466 = vpop.f32.mrb[0].mxu0
  %467 = vmatprep.mubr.bf16.mxu0 %v258
  %468 = vmatmul.mubr.bf16.gmra.mrb[0].mxu0 %v257
  %v469 = vpop.f32.mrb[0].mxu0
  %v470 = vadd.f32 0.0, %v469
  %v471 = vpop.f32.mrb[0].mxu0
  %v472 = vpop.f32.mrb[0].mxu0
  %v473 = vadd.f32 0.0, %v472
  %v474 = vpop.f32.mrb[0].mxu0
  %475 = vmatprep.mubr.bf16.mxu0 %v260
  %476 = vmatmul.mubr.bf16.gmra.mrb[0].mxu0 %v259
  %v477 = vpop.f32.mrb[0].mxu0
  %v478 = vadd.f32 0.0, %v477
  %v479 = vpop.f32.mrb[0].mxu0
  %v480 = vpop.f32.mrb[0].mxu0
  %v481 = vadd.f32 0.0, %v480
  %v482 = vpop.f32.mrb[0].mxu0
  %483 = vmatprep.mubr.bf16.mxu0 %v262
  %484 = vmatmul.mubr.bf16.gmra.mrb[0].mxu0 %v261
  %v485 = vpop.f32.mrb[0].mxu0
  %v486 = vadd.f32 0.0, %v485
  %v487 = vpop.f32.mrb[0].mxu0
  %v488 = vpop.f32.mrb[0].mxu0
  %v489 = vadd.f32 0.0, %v488
  %v490 = vpop.f32.mrb[0].mxu0
  %491 = vmatprep.mubr.bf16.mxu0 %v264
  %492 = vmatmul.mubr.bf16.gmra.mrb[0].mxu0 %v263
  %v493 = vpop.f32.mrb[0].mxu0
  %v494 = vadd.f32 0.0, %v493
  %v495 = vpop.f32.mrb[0].mxu0
  %v496 = vpop.f32.mrb[0].mxu0
  %v497 = vadd.f32 0.0, %v496
  %v498 = vpop.f32.mrb[0].mxu0
  %499 = vmatprep.mubr.bf16.mxu0 %v266
  %500 = vmatmul.mubr.bf16.gmra.mrb[0].mxu0 %v265
  %v501 = vpop.f32.mrb[0].mxu0
  %v502 = vadd.f32 0.0, %v501
  %v503 = vpop.f32.mrb[0].mxu0
  %v504 = vpop.f32.mrb[0].mxu0
  %v505 = vadd.f32 0.0, %v504
  %v506 = vpop.f32.mrb[0].mxu0
  %507 = vmatprep.mubr.bf16.mxu0 %v268
  %508 = vmatmul.mubr.bf16.gmra.mrb[0].mxu0 %v267
  %v509 = vpop.f32.mrb[0].mxu0
  %v510 = vadd.f32 0.0, %v509
  %v511 = vpop.f32.mrb[0].mxu0
  %v512 = vpop.f32.mrb[0].mxu0
  %v513 = vadd.f32 0.0, %v512
  %v514 = vpop.f32.mrb[0].mxu0
  %515 = vmatprep.mubr.bf16.mxu0 %v270
  %516 = vmatmul.mubr.bf16.gmra.mrb[0].mxu0 %v269
  %v517 = vpop.f32.mrb[0].mxu0
  %v518 = vadd.f32 0.0, %v517
  %v519 = vpop.f32.mrb[0].mxu0
  %v520 = vpop.f32.mrb[0].mxu0
  %v521 = vadd.f32 0.0, %v520
  %v522 = vpop.f32.mrb[0].mxu0
  %523 = vmatprep.mubr.bf16.mxu0 %v272
  %524 = vmatmul.mubr.bf16.gmra.mrb[0].mxu0 %v271
  %v525 = vpop.f32.mrb[0].mxu0
  %v526 = vadd.f32 0.0, %v525
  %v527 = vpop.f32.mrb[0].mxu0
  %v528 = vpop.f32.mrb[0].mxu0
  %v529 = vadd.f32 0.0, %v528
  %v530 = vpop.f32.mrb[0].mxu0
  %531 = vmatprep.mubr.bf16.mxu0 %v274
  %532 = vmatmul.mubr.bf16.gmra.mrb[0].mxu0 %v273
  %v533 = vpop.f32.mrb[0].mxu0
  %v534 = vadd.f32 0.0, %v533
  %v535 = vpop.f32.mrb[0].mxu0
  %v536 = vpop.f32.mrb[0].mxu0
  %v537 = vadd.f32 0.0, %v536
  %v538 = vpop.f32.mrb[0].mxu0
  %539 = vmatprep.mubr.bf16.mxu0 %v276
  %540 = vmatmul.mubr.bf16.gmra.mrb[0].mxu0 %v275
  %v541 = vpop.f32.mrb[0].mxu0
  %v542 = vadd.f32 0.0, %v541
  %v543 = vpop.f32.mrb[0].mxu0
  %v544 = vpop.f32.mrb[0].mxu0
  %v545 = vadd.f32 0.0, %v544
  %v546 = vpop.f32.mrb[0].mxu0
  %547 = vmatprep.mubr.bf16.mxu0 %v278
  %548 = vmatmul.mubr.bf16.gmra.mrb[0].mxu0 %v277
  %v549 = vpop.f32.mrb[0].mxu0
  %v550 = vadd.f32 0.0, %v549
  %v551 = vpop.f32.mrb[0].mxu0
  %v552 = vpop.f32.mrb[0].mxu0
  %v553 = vadd.f32 0.0, %v552
  %v554 = vpop.f32.mrb[0].mxu0
  %555 = vmatprep.mubr.bf16.mxu0 %v280
  %556 = vmatmul.mubr.bf16.gmra.mrb[0].mxu0 %v279
  %v557 = vpop.f32.mrb[0].mxu0
  %v558 = vadd.f32 0.0, %v557
  %v559 = vpop.f32.mrb[0].mxu0
  %v560 = vpop.f32.mrb[0].mxu0
  %v561 = vadd.f32 0.0, %v560
  %v562 = vpop.f32.mrb[0].mxu0
  %563 = vmatprep.mubr.bf16.mxu0 %v282
  %564 = vmatmul.mubr.bf16.gmra.mrb[0].mxu0 %v281
  %v565 = vpop.f32.mrb[0].mxu0
  %v566 = vadd.f32 0.0, %v565
  %v567 = vpop.f32.mrb[0].mxu0
  %v568 = vpop.f32.mrb[0].mxu0
  %v569 = vadd.f32 0.0, %v568
  %v570 = vpop.f32.mrb[0].mxu0
  %571 = vdwg.mxu0
  %v572 = vadd.f32 %v91, %v446
  %v573 = vadd.f32 %v92, %v449
  %v574 = vadd.f32 %v93, %v454
  %v575 = vadd.f32 %v94, %v457
  %v576 = vadd.f32 %v95, %v462
  %v577 = vadd.f32 %v96, %v465
  %v578 = vadd.f32 %v97, %v470
  %v579 = vadd.f32 %v98, %v473
  %v580 = vadd.f32 %v99, %v478
  %v581 = vadd.f32 %v100, %v481
  %v582 = vadd.f32 %v101, %v486
  %v583 = vadd.f32 %v102, %v489
  %v584 = vadd.f32 %v103, %v494
  %v585 = vadd.f32 %v104, %v497
  %v586 = vadd.f32 %v105, %v502
  %v587 = vadd.f32 %v106, %v505
  %v588 = vadd.f32 %v107, %v510
  %v589 = vadd.f32 %v108, %v513
  %v590 = vadd.f32 %v109, %v518
  %v591 = vadd.f32 %v110, %v521
  %v592 = vadd.f32 %v111, %v526
  %v593 = vadd.f32 %v112, %v529
  %v594 = vadd.f32 %v113, %v534
  %v595 = vadd.f32 %v114, %v537
  %v596 = vadd.f32 %v115, %v542
  %v597 = vadd.f32 %v116, %v545
  %v598 = vadd.f32 %v117, %v550
  %v599 = vadd.f32 %v118, %v553
  %v600 = vadd.f32 %v119, %v558
  %v601 = vadd.f32 %v120, %v561
  %v602 = vadd.f32 %v121, %v566
  %v603 = vadd.f32 %v122, %v569
  %604 = vst [vmem:[#allocation2] sm:$0xff] %v572
  %605 = vst [vmem:[#allocation2 + $0x8] sm:$0xff] %v573
  %606 = vst [vmem:[#allocation2 + $0x10] sm:$0xff] %v574
  %607 = vst [vmem:[#allocation2 + $0x18] sm:$0xff] %v575
  %608 = vst [vmem:[#allocation2 + $0x20] sm:$0xff] %v576
  %609 = vst [vmem:[#allocation2 + $0x28] sm:$0xff] %v577
  %610 = vst [vmem:[#allocation2 + $0x30] sm:$0xff] %v578
  %611 = vst [vmem:[#allocation2 + $0x38] sm:$0xff] %v579
  %612 = vst [vmem:[#allocation2 + $0x40] sm:$0xff] %v580
  %613 = vst [vmem:[#allocation2 + $0x48] sm:$0xff] %v581
  %614 = vst [vmem:[#allocation2 + $0x50] sm:$0xff] %v582
  %615 = vst [vmem:[#allocation2 + $0x58] sm:$0xff] %v583
  %616 = vst [vmem:[#allocation2 + $0x60] sm:$0xff] %v584
  %617 = vst [vmem:[#allocation2 + $0x68] sm:$0xff] %v585
  %618 = vst [vmem:[#allocation2 + $0x70] sm:$0xff] %v586
  %619 = vst [vmem:[#allocation2 + $0x78] sm:$0xff] %v587
  %620 = vst [vmem:[#allocation2 + $0x80] sm:$0xff] %v588
  %621 = vst [vmem:[#allocation2 + $0x88] sm:$0xff] %v589
  %622 = vst [vmem:[#allocation2 + $0x90] sm:$0xff] %v590
  %623 = vst [vmem:[#allocation2 + $0x98] sm:$0xff] %v591
  %624 = vst [vmem:[#allocation2 + $0xa0] sm:$0xff] %v592
  %625 = vst [vmem:[#allocation2 + $0xa8] sm:$0xff] %v593
  %626 = vst [vmem:[#allocation2 + $0xb0] sm:$0xff] %v594
  %627 = vst [vmem:[#allocation2 + $0xb8] sm:$0xff] %v595
  %628 = vst [vmem:[#allocation2 + $0xc0] sm:$0xff] %v596
  %629 = vst [vmem:[#allocation2 + $0xc8] sm:$0xff] %v597
  %630 = vst [vmem:[#allocation2 + $0xd0] sm:$0xff] %v598
  %631 = vst [vmem:[#allocation2 + $0xd8] sm:$0xff] %v599
  %632 = vst [vmem:[#allocation2 + $0xe0] sm:$0xff] %v600
  %633 = vst [vmem:[#allocation2 + $0xe8] sm:$0xff] %v601
  %634 = vst [vmem:[#allocation2 + $0xf0] sm:$0xff] %v602
  %635 = vst [vmem:[#allocation2 + $0xf8] sm:$0xff] %v603
  // Predicated region
  $region22: #{gcn_multilayers_forward.7} parent=0 // pred_check
    %p636 = pneg %p18
  $region23: #{gcn_multilayers_forward.7} parent=0 // pred_check_branch
    %638 = sbr.rel (%p636) target = $region25
  $region24: #{gcn_multilayers_forward.7} parent=0 // pred_region
    %v639 = vld [vmem:[#allocation2] sm:$0xff]
    %v640 = vld [vmem:[#allocation2 + $0x8] sm:$0xff]
    %v641 = vld [vmem:[#allocation2 + $0x10] sm:$0xff]
    %v642 = vld [vmem:[#allocation2 + $0x18] sm:$0xff]
    %v643 = vld [vmem:[#allocation2 + $0x20] sm:$0xff]
    %v644 = vld [vmem:[#allocation2 + $0x28] sm:$0xff]
    %v645 = vld [vmem:[#allocation2 + $0x30] sm:$0xff]
    %v646 = vld [vmem:[#allocation2 + $0x38] sm:$0xff]
    %v647 = vld [vmem:[#allocation2 + $0x40] sm:$0xff]
    %v648 = vld [vmem:[#allocation2 + $0x48] sm:$0xff]
    %v649 = vld [vmem:[#allocation2 + $0x50] sm:$0xff]
    %v650 = vld [vmem:[#allocation2 + $0x58] sm:$0xff]
    %v651 = vld [vmem:[#allocation2 + $0x60] sm:$0xff]
    %v652 = vld [vmem:[#allocation2 + $0x68] sm:$0xff]
    %v653 = vld [vmem:[#allocation2 + $0x70] sm:$0xff]
    %v654 = vld [vmem:[#allocation2 + $0x78] sm:$0xff]
    %v655 = vld [vmem:[#allocation2 + $0x80] sm:$0xff]
    %v656 = vld [vmem:[#allocation2 + $0x88] sm:$0xff]
    %v657 = vld [vmem:[#allocation2 + $0x90] sm:$0xff]
    %v658 = vld [vmem:[#allocation2 + $0x98] sm:$0xff]
    %v659 = vld [vmem:[#allocation2 + $0xa0] sm:$0xff]
    %v660 = vld [vmem:[#allocation2 + $0xa8] sm:$0xff]
    %v661 = vld [vmem:[#allocation2 + $0xb0] sm:$0xff]
    %v662 = vld [vmem:[#allocation2 + $0xb8] sm:$0xff]
    %v663 = vld [vmem:[#allocation2 + $0xc0] sm:$0xff]
    %v664 = vld [vmem:[#allocation2 + $0xc8] sm:$0xff]
    %v665 = vld [vmem:[#allocation2 + $0xd0] sm:$0xff]
    %v666 = vld [vmem:[#allocation2 + $0xd8] sm:$0xff]
    %v667 = vld [vmem:[#allocation2 + $0xe0] sm:$0xff]
    %v668 = vld [vmem:[#allocation2 + $0xe8] sm:$0xff]
    %v669 = vld [vmem:[#allocation2 + $0xf0] sm:$0xff]
    %v670 = vld [vmem:[#allocation2 + $0xf8] sm:$0xff]
    %v671 = vld [vmem:[%s2] sm:$0xff]
    %v672 = vld [vmem:[%s2 + $0x8] sm:$0xff]
    %v673 = vld [vmem:[%s2 + $0x10] sm:$0xff]
    %v674 = vld [vmem:[%s2 + $0x18] sm:$0xff]
    %v675 = vld [vmem:[%s2 + $0x20] sm:$0xff]
    %v676 = vld [vmem:[%s2 + $0x28] sm:$0xff]
    %v677 = vld [vmem:[%s2 + $0x30] sm:$0xff]
    %v678 = vld [vmem:[%s2 + $0x38] sm:$0xff]
    %v679 = vld [vmem:[%s2 + $0x40] sm:$0xff]
    %v680 = vld [vmem:[%s2 + $0x48] sm:$0xff]
    %v681 = vld [vmem:[%s2 + $0x50] sm:$0xff]
    %v682 = vld [vmem:[%s2 + $0x58] sm:$0xff]
    %v683 = vld [vmem:[%s2 + $0x60] sm:$0xff]
    %v684 = vld [vmem:[%s2 + $0x68] sm:$0xff]
    %v685 = vld [vmem:[%s2 + $0x70] sm:$0xff]
    %v686 = vld [vmem:[%s2 + $0x78] sm:$0xff]
    %v687 = vld [vmem:[%s2 + $0x80] sm:$0xff]
    %v688 = vld [vmem:[%s2 + $0x88] sm:$0xff]
    %v689 = vld [vmem:[%s2 + $0x90] sm:$0xff]
    %v690 = vld [vmem:[%s2 + $0x98] sm:$0xff]
    %v691 = vld [vmem:[%s2 + $0xa0] sm:$0xff]
    %v692 = vld [vmem:[%s2 + $0xa8] sm:$0xff]
    %v693 = vld [vmem:[%s2 + $0xb0] sm:$0xff]
    %v694 = vld [vmem:[%s2 + $0xb8] sm:$0xff]
    %v695 = vld [vmem:[%s2 + $0xc0] sm:$0xff]
    %v696 = vld [vmem:[%s2 + $0xc8] sm:$0xff]
    %v697 = vld [vmem:[%s2 + $0xd0] sm:$0xff]
    %v698 = vld [vmem:[%s2 + $0xd8] sm:$0xff]
    %v699 = vld [vmem:[%s2 + $0xe0] sm:$0xff]
    %v700 = vld [vmem:[%s2 + $0xe8] sm:$0xff]
    %v701 = vld [vmem:[%s2 + $0xf0] sm:$0xff]
    %v702 = vld [vmem:[%s2 + $0xf8] sm:$0xff]
    %704 = vset.pattern.permute.xlu0 0
    %705 = vperm.xlu0 %704, %v671
    %v706 = vpop.permute.xlu0 %705
    %709 = vset.pattern.permute.xlu0 0
    %710 = vperm.xlu0 %709, %v672
    %v711 = vpop.permute.xlu0 %710
    %714 = vset.pattern.permute.xlu0 0
    %715 = vperm.xlu0 %714, %v673
    %v716 = vpop.permute.xlu0 %715
    %719 = vset.pattern.permute.xlu0 0
    %720 = vperm.xlu0 %719, %v674
    %v721 = vpop.permute.xlu0 %720
    %724 = vset.pattern.permute.xlu0 0
    %725 = vperm.xlu0 %724, %v675
    %v726 = vpop.permute.xlu0 %725
    %729 = vset.pattern.permute.xlu0 0
    %730 = vperm.xlu0 %729, %v676
    %v731 = vpop.permute.xlu0 %730
    %734 = vset.pattern.permute.xlu0 0
    %735 = vperm.xlu0 %734, %v677
    %v736 = vpop.permute.xlu0 %735
    %739 = vset.pattern.permute.xlu0 0
    %740 = vperm.xlu0 %739, %v678
    %v741 = vpop.permute.xlu0 %740
    %744 = vset.pattern.permute.xlu0 0
    %745 = vperm.xlu0 %744, %v679
    %v746 = vpop.permute.xlu0 %745
    %749 = vset.pattern.permute.xlu0 0
    %750 = vperm.xlu0 %749, %v680
    %v751 = vpop.permute.xlu0 %750
    %754 = vset.pattern.permute.xlu0 0
    %755 = vperm.xlu0 %754, %v681
    %v756 = vpop.permute.xlu0 %755
    %759 = vset.pattern.permute.xlu0 0
    %760 = vperm.xlu0 %759, %v682
    %v761 = vpop.permute.xlu0 %760
    %764 = vset.pattern.permute.xlu0 0
    %765 = vperm.xlu0 %764, %v683
    %v766 = vpop.permute.xlu0 %765
    %769 = vset.pattern.permute.xlu0 0
    %770 = vperm.xlu0 %769, %v684
    %v771 = vpop.permute.xlu0 %770
    %774 = vset.pattern.permute.xlu0 0
    %775 = vperm.xlu0 %774, %v685
    %v776 = vpop.permute.xlu0 %775
    %779 = vset.pattern.permute.xlu0 0
    %780 = vperm.xlu0 %779, %v686
    %v781 = vpop.permute.xlu0 %780
    %784 = vset.pattern.permute.xlu0 0
    %785 = vperm.xlu0 %784, %v687
    %v786 = vpop.permute.xlu0 %785
    %789 = vset.pattern.permute.xlu0 0
    %790 = vperm.xlu0 %789, %v688
    %v791 = vpop.permute.xlu0 %790
    %794 = vset.pattern.permute.xlu0 0
    %795 = vperm.xlu0 %794, %v689
    %v796 = vpop.permute.xlu0 %795
    %799 = vset.pattern.permute.xlu0 0
    %800 = vperm.xlu0 %799, %v690
    %v801 = vpop.permute.xlu0 %800
    %804 = vset.pattern.permute.xlu0 0
    %805 = vperm.xlu0 %804, %v691
    %v806 = vpop.permute.xlu0 %805
    %809 = vset.pattern.permute.xlu0 0
    %810 = vperm.xlu0 %809, %v692
    %v811 = vpop.permute.xlu0 %810
    %814 = vset.pattern.permute.xlu0 0
    %815 = vperm.xlu0 %814, %v693
    %v816 = vpop.permute.xlu0 %815
    %819 = vset.pattern.permute.xlu0 0
    %820 = vperm.xlu0 %819, %v694
    %v821 = vpop.permute.xlu0 %820
    %824 = vset.pattern.permute.xlu0 0
    %825 = vperm.xlu0 %824, %v695
    %v826 = vpop.permute.xlu0 %825
    %829 = vset.pattern.permute.xlu0 0
    %830 = vperm.xlu0 %829, %v696
    %v831 = vpop.permute.xlu0 %830
    %834 = vset.pattern.permute.xlu0 0
    %835 = vperm.xlu0 %834, %v697
    %v836 = vpop.permute.xlu0 %835
    %839 = vset.pattern.permute.xlu0 0
    %840 = vperm.xlu0 %839, %v698
    %v841 = vpop.permute.xlu0 %840
    %844 = vset.pattern.permute.xlu0 0
    %845 = vperm.xlu0 %844, %v699
    %v846 = vpop.permute.xlu0 %845
    %849 = vset.pattern.permute.xlu0 0
    %850 = vperm.xlu0 %849, %v700
    %v851 = vpop.permute.xlu0 %850
    %854 = vset.pattern.permute.xlu0 0
    %855 = vperm.xlu0 %854, %v701
    %v856 = vpop.permute.xlu0 %855
    %859 = vset.pattern.permute.xlu0 0
    %860 = vperm.xlu0 %859, %v702
    %v861 = vpop.permute.xlu0 %860
    %v863 = vmul.f32 %v639, %v706
    %v864 = vmul.f32 %v640, %v711
    %v865 = vmul.f32 %v641, %v716
    %v866 = vmul.f32 %v642, %v721
    %v867 = vmul.f32 %v643, %v726
    %v868 = vmul.f32 %v644, %v731
    %v869 = vmul.f32 %v645, %v736
    %v870 = vmul.f32 %v646, %v741
    %v871 = vmul.f32 %v647, %v746
    %v872 = vmul.f32 %v648, %v751
    %v873 = vmul.f32 %v649, %v756
    %v874 = vmul.f32 %v650, %v761
    %v875 = vmul.f32 %v651, %v766
    %v876 = vmul.f32 %v652, %v771
    %v877 = vmul.f32 %v653, %v776
    %v878 = vmul.f32 %v654, %v781
    %v879 = vmul.f32 %v655, %v786
    %v880 = vmul.f32 %v656, %v791
    %v881 = vmul.f32 %v657, %v796
    %v882 = vmul.f32 %v658, %v801
    %v883 = vmul.f32 %v659, %v806
    %v884 = vmul.f32 %v660, %v811
    %v885 = vmul.f32 %v661, %v816
    %v886 = vmul.f32 %v662, %v821
    %v887 = vmul.f32 %v663, %v826
    %v888 = vmul.f32 %v664, %v831
    %v889 = vmul.f32 %v665, %v836
    %v890 = vmul.f32 %v666, %v841
    %v891 = vmul.f32 %v667, %v846
    %v892 = vmul.f32 %v668, %v851
    %v893 = vmul.f32 %v669, %v856
    %v894 = vmul.f32 %v670, %v861
    %v895 = vld [vmem:[%s3] sm:$0x1]
    %v897 = vlaneseq
    %v898 = vshrl.u32 %v897, 7
    %v899 = vsub.s32 0, %v898
    %v900 = vrot.slane %v895, %v899
    %v902 = vadd.f32 %v863, %v900
    %v903 = vadd.f32 %v864, %v900
    %v904 = vadd.f32 %v865, %v900
    %v905 = vadd.f32 %v866, %v900
    %v906 = vadd.f32 %v867, %v900
    %v907 = vadd.f32 %v868, %v900
    %v908 = vadd.f32 %v869, %v900
    %v909 = vadd.f32 %v870, %v900
    %v910 = vadd.f32 %v871, %v900
    %v911 = vadd.f32 %v872, %v900
    %v912 = vadd.f32 %v873, %v900
    %v913 = vadd.f32 %v874, %v900
    %v914 = vadd.f32 %v875, %v900
    %v915 = vadd.f32 %v876, %v900
    %v916 = vadd.f32 %v877, %v900
    %v917 = vadd.f32 %v878, %v900
    %v918 = vadd.f32 %v879, %v900
    %v919 = vadd.f32 %v880, %v900
    %v920 = vadd.f32 %v881, %v900
    %v921 = vadd.f32 %v882, %v900
    %v922 = vadd.f32 %v883, %v900
    %v923 = vadd.f32 %v884, %v900
    %v924 = vadd.f32 %v885, %v900
    %v925 = vadd.f32 %v886, %v900
    %v926 = vadd.f32 %v887, %v900
    %v927 = vadd.f32 %v888, %v900
    %v928 = vadd.f32 %v889, %v900
    %v929 = vadd.f32 %v890, %v900
    %v930 = vadd.f32 %v891, %v900
    %v931 = vadd.f32 %v892, %v900
    %v932 = vadd.f32 %v893, %v900
    %v933 = vadd.f32 %v894, %v900
    %934 = vst [vmem:[%s4] sm:$0xff] %v902
    %935 = vst [vmem:[%s4 + $0x8] sm:$0xff] %v903
    %936 = vst [vmem:[%s4 + $0x10] sm:$0xff] %v904
    %937 = vst [vmem:[%s4 + $0x18] sm:$0xff] %v905
    %938 = vst [vmem:[%s4 + $0x20] sm:$0xff] %v906
    %939 = vst [vmem:[%s4 + $0x28] sm:$0xff] %v907
    %940 = vst [vmem:[%s4 + $0x30] sm:$0xff] %v908
    %941 = vst [vmem:[%s4 + $0x38] sm:$0xff] %v909
    %942 = vst [vmem:[%s4 + $0x40] sm:$0xff] %v910
    %943 = vst [vmem:[%s4 + $0x48] sm:$0xff] %v911
    %944 = vst [vmem:[%s4 + $0x50] sm:$0xff] %v912
    %945 = vst [vmem:[%s4 + $0x58] sm:$0xff] %v913
    %946 = vst [vmem:[%s4 + $0x60] sm:$0xff] %v914
    %947 = vst [vmem:[%s4 + $0x68] sm:$0xff] %v915
    %948 = vst [vmem:[%s4 + $0x70] sm:$0xff] %v916
    %949 = vst [vmem:[%s4 + $0x78] sm:$0xff] %v917
    %950 = vst [vmem:[%s4 + $0x80] sm:$0xff] %v918
    %951 = vst [vmem:[%s4 + $0x88] sm:$0xff] %v919
    %952 = vst [vmem:[%s4 + $0x90] sm:$0xff] %v920
    %953 = vst [vmem:[%s4 + $0x98] sm:$0xff] %v921
    %954 = vst [vmem:[%s4 + $0xa0] sm:$0xff] %v922
    %955 = vst [vmem:[%s4 + $0xa8] sm:$0xff] %v923
    %956 = vst [vmem:[%s4 + $0xb0] sm:$0xff] %v924
    %957 = vst [vmem:[%s4 + $0xb8] sm:$0xff] %v925
    %958 = vst [vmem:[%s4 + $0xc0] sm:$0xff] %v926
    %959 = vst [vmem:[%s4 + $0xc8] sm:$0xff] %v927
    %960 = vst [vmem:[%s4 + $0xd0] sm:$0xff] %v928
    %961 = vst [vmem:[%s4 + $0xd8] sm:$0xff] %v929
    %962 = vst [vmem:[%s4 + $0xe0] sm:$0xff] %v930
    %963 = vst [vmem:[%s4 + $0xe8] sm:$0xff] %v931
    %964 = vst [vmem:[%s4 + $0xf0] sm:$0xff] %v932
    %965 = vst [vmem:[%s4 + $0xf8] sm:$0xff] %v933
  $region25: #{gcn_multilayers_forward.7} parent=0 // pred_fallthru
    _
  // Predicated region
  $region26: #{gcn_multilayers_forward.7} parent=0 // pred_check
    _
  $region27: #{gcn_multilayers_forward.7} parent=0 // pred_check_branch
    %967 = sbr.rel (0) target = $region29
  $region28: #{gcn_multilayers_forward.7} parent=0 // pred_region
    _
  $region29: #{gcn_multilayers_forward.7} parent=0 // pred_fallthru
    _
  // Predicated region
  $region30: #{gcn_multilayers_forward.7} parent=0 // pred_check
    _
  $region31: #{gcn_multilayers_forward.7} parent=0 // pred_check_branch
    %969 = sbr.rel (0) target = $region33
  $region32: #{gcn_multilayers_forward.7} parent=0 // pred_region
    _
  $region33: #{gcn_multilayers_forward.7} parent=0 // pred_fallthru
    _

// kernel: gcn_multilayers_forward.5
$region0: #{gcn_multilayers_forward.5}
  #allocation0 [shape = 'u32[]', space=smem, size = 0x4, offset = 0x4, fixed_abs, tag = 'smem constant byte address 0x4 - core index']
  #allocation1 [shape = 'u32[144,128]{1,0:T(1,128)}', space=vmem, size = 0x12000, scoped, tag = 'internal scratch']
  #allocation2 [shape = 'f32[256,128]{1,0:T(8,128)}', space=vmem, size = 0x20000, scoped, tag = 'scratch operand']
  %s0 = inlined_call_operand.vmem [shape: bf16[256,256], index: 0, kind: input, shape index: {}]
  %s1 = inlined_call_operand.vmem [shape: bf16[256,128], index: 1, kind: input, shape index: {}]
  %s2 = inlined_call_operand.vmem [shape: f32[256,1], index: 2, kind: input, shape index: {}]
  %s3 = inlined_call_operand.vmem [shape: f32[1,128], index: 3, kind: input, shape index: {}]
  %s4 = inlined_call_operand.vmem [shape: bf16[256,128], index: 4, kind: output, shape index: {}]
  %s5 = sld [smem:[#allocation0]]
  $region34: #{gcn_multilayers_forward.5} parent=0
    _
  %s7 = ssub.s32 1, %s5
  %s8 = scalar_select 0, %s7, %s5
  // Predicated region
  $region2: #{gcn_multilayers_forward.5} parent=0 // pred_check
    _
  $region3: #{gcn_multilayers_forward.5} parent=0 // pred_check_branch
    %10 = sbr.rel (0) target = $region5
  $region4: #{gcn_multilayers_forward.5} parent=0 // pred_region
    _
  $region5: #{gcn_multilayers_forward.5} parent=0 // pred_fallthru
    _
  // Predicated region
  $region6: #{gcn_multilayers_forward.5} parent=0 // pred_check
    _
  $region7: #{gcn_multilayers_forward.5} parent=0 // pred_check_branch
    %12 = sbr.rel (0) target = $region9
  $region8: #{gcn_multilayers_forward.5} parent=0 // pred_region
    _
  $region9: #{gcn_multilayers_forward.5} parent=0 // pred_fallthru
    _
  // Predicated region
  $region10: #{gcn_multilayers_forward.5} parent=0 // pred_check
    _
  $region11: #{gcn_multilayers_forward.5} parent=0 // pred_check_branch
    %14 = sbr.rel (0) target = $region13
  $region12: #{gcn_multilayers_forward.5} parent=0 // pred_region
    _
  $region13: #{gcn_multilayers_forward.5} parent=0 // pred_fallthru
    _
  // Predicated region
  $region14: #{gcn_multilayers_forward.5} parent=0 // pred_check
    _
  $region15: #{gcn_multilayers_forward.5} parent=0 // pred_check_branch
    %16 = sbr.rel (0) target = $region17
  $region16: #{gcn_multilayers_forward.5} parent=0 // pred_region
    _
  $region17: #{gcn_multilayers_forward.5} parent=0 // pred_fallthru
    _
  %p18 = scmp.eq.s32.totalorder 0, 0
  // Predicated region
  $region18: #{gcn_multilayers_forward.5} parent=0 // pred_check
    %p19 = pneg %p18
  $region19: #{gcn_multilayers_forward.5} parent=0 // pred_check_branch
    %21 = sbr.rel (%p19) target = $region21
  $region20: #{gcn_multilayers_forward.5} parent=0 // pred_region
    %22 = vst [vmem:[#allocation2] sm:$0xff] 0.0
    %23 = vst [vmem:[#allocation2 + $0x8] sm:$0xff] 0.0
    %24 = vst [vmem:[#allocation2 + $0x10] sm:$0xff] 0.0
    %25 = vst [vmem:[#allocation2 + $0x18] sm:$0xff] 0.0
    %26 = vst [vmem:[#allocation2 + $0x20] sm:$0xff] 0.0
    %27 = vst [vmem:[#allocation2 + $0x28] sm:$0xff] 0.0
    %28 = vst [vmem:[#allocation2 + $0x30] sm:$0xff] 0.0
    %29 = vst [vmem:[#allocation2 + $0x38] sm:$0xff] 0.0
    %30 = vst [vmem:[#allocation2 + $0x40] sm:$0xff] 0.0
    %31 = vst [vmem:[#allocation2 + $0x48] sm:$0xff] 0.0
    %32 = vst [vmem:[#allocation2 + $0x50] sm:$0xff] 0.0
    %33 = vst [vmem:[#allocation2 + $0x58] sm:$0xff] 0.0
    %34 = vst [vmem:[#allocation2 + $0x60] sm:$0xff] 0.0
    %35 = vst [vmem:[#allocation2 + $0x68] sm:$0xff] 0.0
    %36 = vst [vmem:[#allocation2 + $0x70] sm:$0xff] 0.0
    %37 = vst [vmem:[#allocation2 + $0x78] sm:$0xff] 0.0
    %38 = vst [vmem:[#allocation2 + $0x80] sm:$0xff] 0.0
    %39 = vst [vmem:[#allocation2 + $0x88] sm:$0xff] 0.0
    %40 = vst [vmem:[#allocation2 + $0x90] sm:$0xff] 0.0
    %41 = vst [vmem:[#allocation2 + $0x98] sm:$0xff] 0.0
    %42 = vst [vmem:[#allocation2 + $0xa0] sm:$0xff] 0.0
    %43 = vst [vmem:[#allocation2 + $0xa8] sm:$0xff] 0.0
    %44 = vst [vmem:[#allocation2 + $0xb0] sm:$0xff] 0.0
    %45 = vst [vmem:[#allocation2 + $0xb8] sm:$0xff] 0.0
    %46 = vst [vmem:[#allocation2 + $0xc0] sm:$0xff] 0.0
    %47 = vst [vmem:[#allocation2 + $0xc8] sm:$0xff] 0.0
    %48 = vst [vmem:[#allocation2 + $0xd0] sm:$0xff] 0.0
    %49 = vst [vmem:[#allocation2 + $0xd8] sm:$0xff] 0.0
    %50 = vst [vmem:[#allocation2 + $0xe0] sm:$0xff] 0.0
    %51 = vst [vmem:[#allocation2 + $0xe8] sm:$0xff] 0.0
    %52 = vst [vmem:[#allocation2 + $0xf0] sm:$0xff] 0.0
    %53 = vst [vmem:[#allocation2 + $0xf8] sm:$0xff] 0.0
  $region21: #{gcn_multilayers_forward.5} parent=0 // pred_fallthru
    _
  %s54 = smul.u32 0, 256
  %s55 = sshra.s32 %s54, 3
  %s56 = sand.u32 %s54, 7
  %s57 = smul.addr %s55, 4
  %s58 = scalar_lea.vmem %s1, %s57
  %v59 = vld [vmem:[%s58] sm:$0xf]
  %v60 = vld [vmem:[%s58 + $0x4] sm:$0xf]
  %v61 = vld [vmem:[%s58 + $0x8] sm:$0xf]
  %v62 = vld [vmem:[%s58 + $0xc] sm:$0xf]
  %v63 = vld [vmem:[%s58 + $0x10] sm:$0xf]
  %v64 = vld [vmem:[%s58 + $0x14] sm:$0xf]
  %v65 = vld [vmem:[%s58 + $0x18] sm:$0xf]
  %v66 = vld [vmem:[%s58 + $0x1c] sm:$0xf]
  %v67 = vld [vmem:[%s58 + $0x20] sm:$0xf]
  %v68 = vld [vmem:[%s58 + $0x24] sm:$0xf]
  %v69 = vld [vmem:[%s58 + $0x28] sm:$0xf]
  %v70 = vld [vmem:[%s58 + $0x2c] sm:$0xf]
  %v71 = vld [vmem:[%s58 + $0x30] sm:$0xf]
  %v72 = vld [vmem:[%s58 + $0x34] sm:$0xf]
  %v73 = vld [vmem:[%s58 + $0x38] sm:$0xf]
  %v74 = vld [vmem:[%s58 + $0x3c] sm:$0xf]
  %v75 = vld [vmem:[%s58 + $0x40] sm:$0xf]
  %v76 = vld [vmem:[%s58 + $0x44] sm:$0xf]
  %v77 = vld [vmem:[%s58 + $0x48] sm:$0xf]
  %v78 = vld [vmem:[%s58 + $0x4c] sm:$0xf]
  %v79 = vld [vmem:[%s58 + $0x50] sm:$0xf]
  %v80 = vld [vmem:[%s58 + $0x54] sm:$0xf]
  %v81 = vld [vmem:[%s58 + $0x58] sm:$0xf]
  %v82 = vld [vmem:[%s58 + $0x5c] sm:$0xf]
  %v83 = vld [vmem:[%s58 + $0x60] sm:$0xf]
  %v84 = vld [vmem:[%s58 + $0x64] sm:$0xf]
  %v85 = vld [vmem:[%s58 + $0x68] sm:$0xf]
  %v86 = vld [vmem:[%s58 + $0x6c] sm:$0xf]
  %v87 = vld [vmem:[%s58 + $0x70] sm:$0xf]
  %v88 = vld [vmem:[%s58 + $0x74] sm:$0xf]
  %v89 = vld [vmem:[%s58 + $0x78] sm:$0xf]
  %v90 = vld [vmem:[%s58 + $0x7c] sm:$0xf]
  %v91 = vld [vmem:[#allocation2] sm:$0xff]
  %v92 = vld [vmem:[#allocation2 + $0x8] sm:$0xff]
  %v93 = vld [vmem:[#allocation2 + $0x10] sm:$0xff]
  %v94 = vld [vmem:[#allocation2 + $0x18] sm:$0xff]
  %v95 = vld [vmem:[#allocation2 + $0x20] sm:$0xff]
  %v96 = vld [vmem:[#allocation2 + $0x28] sm:$0xff]
  %v97 = vld [vmem:[#allocation2 + $0x30] sm:$0xff]
  %v98 = vld [vmem:[#allocation2 + $0x38] sm:$0xff]
  %v99 = vld [vmem:[#allocation2 + $0x40] sm:$0xff]
  %v100 = vld [vmem:[#allocation2 + $0x48] sm:$0xff]
  %v101 = vld [vmem:[#allocation2 + $0x50] sm:$0xff]
  %v102 = vld [vmem:[#allocation2 + $0x58] sm:$0xff]
  %v103 = vld [vmem:[#allocation2 + $0x60] sm:$0xff]
  %v104 = vld [vmem:[#allocation2 + $0x68] sm:$0xff]
  %v105 = vld [vmem:[#allocation2 + $0x70] sm:$0xff]
  %v106 = vld [vmem:[#allocation2 + $0x78] sm:$0xff]
  %v107 = vld [vmem:[#allocation2 + $0x80] sm:$0xff]
  %v108 = vld [vmem:[#allocation2 + $0x88] sm:$0xff]
  %v109 = vld [vmem:[#allocation2 + $0x90] sm:$0xff]
  %v110 = vld [vmem:[#allocation2 + $0x98] sm:$0xff]
  %v111 = vld [vmem:[#allocation2 + $0xa0] sm:$0xff]
  %v112 = vld [vmem:[#allocation2 + $0xa8] sm:$0xff]
  %v113 = vld [vmem:[#allocation2 + $0xb0] sm:$0xff]
  %v114 = vld [vmem:[#allocation2 + $0xb8] sm:$0xff]
  %v115 = vld [vmem:[#allocation2 + $0xc0] sm:$0xff]
  %v116 = vld [vmem:[#allocation2 + $0xc8] sm:$0xff]
  %v117 = vld [vmem:[#allocation2 + $0xd0] sm:$0xff]
  %v118 = vld [vmem:[#allocation2 + $0xd8] sm:$0xff]
  %v119 = vld [vmem:[#allocation2 + $0xe0] sm:$0xff]
  %v120 = vld [vmem:[#allocation2 + $0xe8] sm:$0xff]
  %v121 = vld [vmem:[#allocation2 + $0xf0] sm:$0xff]
  %v122 = vld [vmem:[#allocation2 + $0xf8] sm:$0xff]
  %v123 = vld [vmem:[%s0] sm:$0xff]
  %v124 = vld [vmem:[%s0 + $0x8] sm:$0xff]
  %v125 = vld [vmem:[%s0 + $0x10] sm:$0xff]
  %v126 = vld [vmem:[%s0 + $0x18] sm:$0xff]
  %v127 = vld [vmem:[%s0 + $0x20] sm:$0xff]
  %v128 = vld [vmem:[%s0 + $0x28] sm:$0xff]
  %v129 = vld [vmem:[%s0 + $0x30] sm:$0xff]
  %v130 = vld [vmem:[%s0 + $0x38] sm:$0xff]
  %v131 = vld [vmem:[%s0 + $0x40] sm:$0xff]
  %v132 = vld [vmem:[%s0 + $0x48] sm:$0xff]
  %v133 = vld [vmem:[%s0 + $0x50] sm:$0xff]
  %v134 = vld [vmem:[%s0 + $0x58] sm:$0xff]
  %v135 = vld [vmem:[%s0 + $0x60] sm:$0xff]
  %v136 = vld [vmem:[%s0 + $0x68] sm:$0xff]
  %v137 = vld [vmem:[%s0 + $0x70] sm:$0xff]
  %v138 = vld [vmem:[%s0 + $0x78] sm:$0xff]
  %v139 = vld [vmem:[%s0 + $0x80] sm:$0xff]
  %v140 = vld [vmem:[%s0 + $0x88] sm:$0xff]
  %v141 = vld [vmem:[%s0 + $0x90] sm:$0xff]
  %v142 = vld [vmem:[%s0 + $0x98] sm:$0xff]
  %v143 = vld [vmem:[%s0 + $0xa0] sm:$0xff]
  %v144 = vld [vmem:[%s0 + $0xa8] sm:$0xff]
  %v145 = vld [vmem:[%s0 + $0xb0] sm:$0xff]
  %v146 = vld [vmem:[%s0 + $0xb8] sm:$0xff]
  %v147 = vld [vmem:[%s0 + $0xc0] sm:$0xff]
  %v148 = vld [vmem:[%s0 + $0xc8] sm:$0xff]
  %v149 = vld [vmem:[%s0 + $0xd0] sm:$0xff]
  %v150 = vld [vmem:[%s0 + $0xd8] sm:$0xff]
  %v151 = vld [vmem:[%s0 + $0xe0] sm:$0xff]
  %v152 = vld [vmem:[%s0 + $0xe8] sm:$0xff]
  %v153 = vld [vmem:[%s0 + $0xf0] sm:$0xff]
  %v154 = vld [vmem:[%s0 + $0xf8] sm:$0xff]
  %v187 = vunpack.c.l.b16 %v123
  %v188 = vunpack.c.h.b16 %v123
  %v189 = vunpack.c.l.b16 %v124
  %v190 = vunpack.c.h.b16 %v124
  %v191 = vunpack.c.l.b16 %v125
  %v192 = vunpack.c.h.b16 %v125
  %v193 = vunpack.c.l.b16 %v126
  %v194 = vunpack.c.h.b16 %v126
  %v195 = vunpack.c.l.b16 %v127
  %v196 = vunpack.c.h.b16 %v127
  %v197 = vunpack.c.l.b16 %v128
  %v198 = vunpack.c.h.b16 %v128
  %v199 = vunpack.c.l.b16 %v129
  %v200 = vunpack.c.h.b16 %v129
  %v201 = vunpack.c.l.b16 %v130
  %v202 = vunpack.c.h.b16 %v130
  %v203 = vunpack.c.l.b16 %v131
  %v204 = vunpack.c.h.b16 %v131
  %v205 = vunpack.c.l.b16 %v132
  %v206 = vunpack.c.h.b16 %v132
  %v207 = vunpack.c.l.b16 %v133
  %v208 = vunpack.c.h.b16 %v133
  %v209 = vunpack.c.l.b16 %v134
  %v210 = vunpack.c.h.b16 %v134
  %v211 = vunpack.c.l.b16 %v135
  %v212 = vunpack.c.h.b16 %v135
  %v213 = vunpack.c.l.b16 %v136
  %v214 = vunpack.c.h.b16 %v136
  %v215 = vunpack.c.l.b16 %v137
  %v216 = vunpack.c.h.b16 %v137
  %v217 = vunpack.c.l.b16 %v138
  %v218 = vunpack.c.h.b16 %v138
  %v219 = vunpack.c.l.b16 %v139
  %v220 = vunpack.c.h.b16 %v139
  %v221 = vunpack.c.l.b16 %v140
  %v222 = vunpack.c.h.b16 %v140
  %v223 = vunpack.c.l.b16 %v141
  %v224 = vunpack.c.h.b16 %v141
  %v225 = vunpack.c.l.b16 %v142
  %v226 = vunpack.c.h.b16 %v142
  %v227 = vunpack.c.l.b16 %v143
  %v228 = vunpack.c.h.b16 %v143
  %v229 = vunpack.c.l.b16 %v144
  %v230 = vunpack.c.h.b16 %v144
  %v231 = vunpack.c.l.b16 %v145
  %v232 = vunpack.c.h.b16 %v145
  %v233 = vunpack.c.l.b16 %v146
  %v234 = vunpack.c.h.b16 %v146
  %v235 = vunpack.c.l.b16 %v147
  %v236 = vunpack.c.h.b16 %v147
  %v237 = vunpack.c.l.b16 %v148
  %v238 = vunpack.c.h.b16 %v148
  %v239 = vunpack.c.l.b16 %v149
  %v240 = vunpack.c.h.b16 %v149
  %v241 = vunpack.c.l.b16 %v150
  %v242 = vunpack.c.h.b16 %v150
  %v243 = vunpack.c.l.b16 %v151
  %v244 = vunpack.c.h.b16 %v151
  %v245 = vunpack.c.l.b16 %v152
  %v246 = vunpack.c.h.b16 %v152
  %v247 = vunpack.c.l.b16 %v153
  %v248 = vunpack.c.h.b16 %v153
  %v249 = vunpack.c.l.b16 %v154
  %v250 = vunpack.c.h.b16 %v154
  %v251 = vpack.c.b16 %v189, %v187
  %v252 = vpack.c.b16 %v190, %v188
  %v253 = vpack.c.b16 %v193, %v191
  %v254 = vpack.c.b16 %v194, %v192
  %v255 = vpack.c.b16 %v197, %v195
  %v256 = vpack.c.b16 %v198, %v196
  %v257 = vpack.c.b16 %v201, %v199
  %v258 = vpack.c.b16 %v202, %v200
  %v259 = vpack.c.b16 %v205, %v203
  %v260 = vpack.c.b16 %v206, %v204
  %v261 = vpack.c.b16 %v209, %v207
  %v262 = vpack.c.b16 %v210, %v208
  %v263 = vpack.c.b16 %v213, %v211
  %v264 = vpack.c.b16 %v214, %v212
  %v265 = vpack.c.b16 %v217, %v215
  %v266 = vpack.c.b16 %v218, %v216
  %v267 = vpack.c.b16 %v221, %v219
  %v268 = vpack.c.b16 %v222, %v220
  %v269 = vpack.c.b16 %v225, %v223
  %v270 = vpack.c.b16 %v226, %v224
  %v271 = vpack.c.b16 %v229, %v227
  %v272 = vpack.c.b16 %v230, %v228
  %v273 = vpack.c.b16 %v233, %v231
  %v274 = vpack.c.b16 %v234, %v232
  %v275 = vpack.c.b16 %v237, %v235
  %v276 = vpack.c.b16 %v238, %v236
  %v277 = vpack.c.b16 %v241, %v239
  %v278 = vpack.c.b16 %v242, %v240
  %v279 = vpack.c.b16 %v245, %v243
  %v280 = vpack.c.b16 %v246, %v244
  %v281 = vpack.c.b16 %v249, %v247
  %v282 = vpack.c.b16 %v250, %v248
  %v347 = vunpack.c.l.b16 %v59
  %v348 = vunpack.c.l.b16 %v60
  %v349 = vunpack.c.l.b16 %v61
  %v350 = vunpack.c.l.b16 %v62
  %v351 = vunpack.c.l.b16 %v63
  %v352 = vunpack.c.l.b16 %v64
  %v353 = vunpack.c.l.b16 %v65
  %v354 = vunpack.c.l.b16 %v66
  %v355 = vunpack.c.l.b16 %v67
  %v356 = vunpack.c.l.b16 %v68
  %v357 = vunpack.c.l.b16 %v69
  %v358 = vunpack.c.l.b16 %v70
  %v359 = vunpack.c.l.b16 %v71
  %v360 = vunpack.c.l.b16 %v72
  %v361 = vunpack.c.l.b16 %v73
  %v362 = vunpack.c.l.b16 %v74
  %v363 = vunpack.c.l.b16 %v75
  %v364 = vunpack.c.l.b16 %v76
  %v365 = vunpack.c.l.b16 %v77
  %v366 = vunpack.c.l.b16 %v78
  %v367 = vunpack.c.l.b16 %v79
  %v368 = vunpack.c.l.b16 %v80
  %v369 = vunpack.c.l.b16 %v81
  %v370 = vunpack.c.l.b16 %v82
  %v371 = vunpack.c.l.b16 %v83
  %v372 = vunpack.c.l.b16 %v84
  %v373 = vunpack.c.l.b16 %v85
  %v374 = vunpack.c.l.b16 %v86
  %v375 = vunpack.c.l.b16 %v87
  %v376 = vunpack.c.l.b16 %v88
  %v377 = vunpack.c.l.b16 %v89
  %v378 = vunpack.c.l.b16 %v90
  %v379 = vpack.c.b16 %v348, %v347
  %v380 = vpack.c.b16 %v350, %v349
  %v381 = vpack.c.b16 %v352, %v351
  %v382 = vpack.c.b16 %v354, %v353
  %v383 = vpack.c.b16 %v356, %v355
  %v384 = vpack.c.b16 %v358, %v357
  %v385 = vpack.c.b16 %v360, %v359
  %v386 = vpack.c.b16 %v362, %v361
  %v387 = vpack.c.b16 %v364, %v363
  %v388 = vpack.c.b16 %v366, %v365
  %v389 = vpack.c.b16 %v368, %v367
  %v390 = vpack.c.b16 %v370, %v369
  %v391 = vpack.c.b16 %v372, %v371
  %v392 = vpack.c.b16 %v374, %v373
  %v393 = vpack.c.b16 %v376, %v375
  %v394 = vpack.c.b16 %v378, %v377
  %411 = vmatprep.subr.bf16.mxu0 0
  %412 = vmatpush1.bf16.msra.mxu0 %v379
  %413 = vmatprep.subr.bf16.mxu0 0
  %414 = vmatpush1.bf16.msra.mxu0 %v380
  %415 = vmatprep.subr.bf16.mxu0 0
  %416 = vmatpush1.bf16.msra.mxu0 %v381
  %417 = vmatprep.subr.bf16.mxu0 0
  %418 = vmatpush1.bf16.msra.mxu0 %v382
  %419 = vmatprep.subr.bf16.mxu0 0
  %420 = vmatpush1.bf16.msra.mxu0 %v383
  %421 = vmatprep.subr.bf16.mxu0 0
  %422 = vmatpush1.bf16.msra.mxu0 %v384
  %423 = vmatprep.subr.bf16.mxu0 0
  %424 = vmatpush1.bf16.msra.mxu0 %v385
  %425 = vmatprep.subr.bf16.mxu0 0
  %426 = vmatpush1.bf16.msra.mxu0 %v386
  %427 = vmatprep.subr.bf16.mxu0 0
  %428 = vmatpush1.bf16.msra.mxu0 %v387
  %429 = vmatprep.subr.bf16.mxu0 0
  %430 = vmatpush1.bf16.msra.mxu0 %v388
  %431 = vmatprep.subr.bf16.mxu0 0
  %432 = vmatpush1.bf16.msra.mxu0 %v389
  %433 = vmatprep.subr.bf16.mxu0 0
  %434 = vmatpush1.bf16.msra.mxu0 %v390
  %435 = vmatprep.subr.bf16.mxu0 0
  %436 = vmatpush1.bf16.msra.mxu0 %v391
  %437 = vmatprep.subr.bf16.mxu0 0
  %438 = vmatpush1.bf16.msra.mxu0 %v392
  %439 = vmatprep.subr.bf16.mxu0 0
  %440 = vmatpush1.bf16.msra.mxu0 %v393
  %441 = vmatprep.subr.bf16.mxu0 0
  %442 = vmatpush1.bf16.msra.mxu0 %v394
  %443 = vmatprep.mubr.bf16.mxu0 %v252
  %444 = vmatmul.mubr.bf16.gmra.mrb[0].mxu0 %v251
  %v445 = vpop.f32.mrb[0].mxu0
  %v446 = vadd.f32 0.0, %v445
  %v447 = vpop.f32.mrb[0].mxu0
  %v448 = vpop.f32.mrb[0].mxu0
  %v449 = vadd.f32 0.0, %v448
  %v450 = vpop.f32.mrb[0].mxu0
  %451 = vmatprep.mubr.bf16.mxu0 %v254
  %452 = vmatmul.mubr.bf16.gmra.mrb[0].mxu0 %v253
  %v453 = vpop.f32.mrb[0].mxu0
  %v454 = vadd.f32 0.0, %v453
  %v455 = vpop.f32.mrb[0].mxu0
  %v456 = vpop.f32.mrb[0].mxu0
  %v457 = vadd.f32 0.0, %v456
  %v458 = vpop.f32.mrb[0].mxu0
  %459 = vmatprep.mubr.bf16.mxu0 %v256
  %460 = vmatmul.mubr.bf16.gmra.mrb[0].mxu0 %v255
  %v461 = vpop.f32.mrb[0].mxu0
  %v462 = vadd.f32 0.0, %v461
  %v463 = vpop.f32.mrb[0].mxu0
  %v464 = vpop.f32.mrb[0].mxu0
  %v465 = vadd.f32 0.0, %v464
  %v466 = vpop.f32.mrb[0].mxu0
  %467 = vmatprep.mubr.bf16.mxu0 %v258
  %468 = vmatmul.mubr.bf16.gmra.mrb[0].mxu0 %v257
  %v469 = vpop.f32.mrb[0].mxu0
  %v470 = vadd.f32 0.0, %v469
  %v471 = vpop.f32.mrb[0].mxu0
  %v472 = vpop.f32.mrb[0].mxu0
  %v473 = vadd.f32 0.0, %v472
  %v474 = vpop.f32.mrb[0].mxu0
  %475 = vmatprep.mubr.bf16.mxu0 %v260
  %476 = vmatmul.mubr.bf16.gmra.mrb[0].mxu0 %v259
  %v477 = vpop.f32.mrb[0].mxu0
  %v478 = vadd.f32 0.0, %v477
  %v479 = vpop.f32.mrb[0].mxu0
  %v480 = vpop.f32.mrb[0].mxu0
  %v481 = vadd.f32 0.0, %v480
  %v482 = vpop.f32.mrb[0].mxu0
  %483 = vmatprep.mubr.bf16.mxu0 %v262
  %484 = vmatmul.mubr.bf16.gmra.mrb[0].mxu0 %v261
  %v485 = vpop.f32.mrb[0].mxu0
  %v486 = vadd.f32 0.0, %v485
  %v487 = vpop.f32.mrb[0].mxu0
  %v488 = vpop.f32.mrb[0].mxu0
  %v489 = vadd.f32 0.0, %v488
  %v490 = vpop.f32.mrb[0].mxu0
  %491 = vmatprep.mubr.bf16.mxu0 %v264
  %492 = vmatmul.mubr.bf16.gmra.mrb[0].mxu0 %v263
  %v493 = vpop.f32.mrb[0].mxu0
  %v494 = vadd.f32 0.0, %v493
  %v495 = vpop.f32.mrb[0].mxu0
  %v496 = vpop.f32.mrb[0].mxu0
  %v497 = vadd.f32 0.0, %v496
  %v498 = vpop.f32.mrb[0].mxu0
  %499 = vmatprep.mubr.bf16.mxu0 %v266
  %500 = vmatmul.mubr.bf16.gmra.mrb[0].mxu0 %v265
  %v501 = vpop.f32.mrb[0].mxu0
  %v502 = vadd.f32 0.0, %v501
  %v503 = vpop.f32.mrb[0].mxu0
  %v504 = vpop.f32.mrb[0].mxu0
  %v505 = vadd.f32 0.0, %v504
  %v506 = vpop.f32.mrb[0].mxu0
  %507 = vmatprep.mubr.bf16.mxu0 %v268
  %508 = vmatmul.mubr.bf16.gmra.mrb[0].mxu0 %v267
  %v509 = vpop.f32.mrb[0].mxu0
  %v510 = vadd.f32 0.0, %v509
  %v511 = vpop.f32.mrb[0].mxu0
  %v512 = vpop.f32.mrb[0].mxu0
  %v513 = vadd.f32 0.0, %v512
  %v514 = vpop.f32.mrb[0].mxu0
  %515 = vmatprep.mubr.bf16.mxu0 %v270
  %516 = vmatmul.mubr.bf16.gmra.mrb[0].mxu0 %v269
  %v517 = vpop.f32.mrb[0].mxu0
  %v518 = vadd.f32 0.0, %v517
  %v519 = vpop.f32.mrb[0].mxu0
  %v520 = vpop.f32.mrb[0].mxu0
  %v521 = vadd.f32 0.0, %v520
  %v522 = vpop.f32.mrb[0].mxu0
  %523 = vmatprep.mubr.bf16.mxu0 %v272
  %524 = vmatmul.mubr.bf16.gmra.mrb[0].mxu0 %v271
  %v525 = vpop.f32.mrb[0].mxu0
  %v526 = vadd.f32 0.0, %v525
  %v527 = vpop.f32.mrb[0].mxu0
  %v528 = vpop.f32.mrb[0].mxu0
  %v529 = vadd.f32 0.0, %v528
  %v530 = vpop.f32.mrb[0].mxu0
  %531 = vmatprep.mubr.bf16.mxu0 %v274
  %532 = vmatmul.mubr.bf16.gmra.mrb[0].mxu0 %v273
  %v533 = vpop.f32.mrb[0].mxu0
  %v534 = vadd.f32 0.0, %v533
  %v535 = vpop.f32.mrb[0].mxu0
  %v536 = vpop.f32.mrb[0].mxu0
  %v537 = vadd.f32 0.0, %v536
  %v538 = vpop.f32.mrb[0].mxu0
  %539 = vmatprep.mubr.bf16.mxu0 %v276
  %540 = vmatmul.mubr.bf16.gmra.mrb[0].mxu0 %v275
  %v541 = vpop.f32.mrb[0].mxu0
  %v542 = vadd.f32 0.0, %v541
  %v543 = vpop.f32.mrb[0].mxu0
  %v544 = vpop.f32.mrb[0].mxu0
  %v545 = vadd.f32 0.0, %v544
  %v546 = vpop.f32.mrb[0].mxu0
  %547 = vmatprep.mubr.bf16.mxu0 %v278
  %548 = vmatmul.mubr.bf16.gmra.mrb[0].mxu0 %v277
  %v549 = vpop.f32.mrb[0].mxu0
  %v550 = vadd.f32 0.0, %v549
  %v551 = vpop.f32.mrb[0].mxu0
  %v552 = vpop.f32.mrb[0].mxu0
  %v553 = vadd.f32 0.0, %v552
  %v554 = vpop.f32.mrb[0].mxu0
  %555 = vmatprep.mubr.bf16.mxu0 %v280
  %556 = vmatmul.mubr.bf16.gmra.mrb[0].mxu0 %v279
  %v557 = vpop.f32.mrb[0].mxu0
  %v558 = vadd.f32 0.0, %v557
  %v559 = vpop.f32.mrb[0].mxu0
  %v560 = vpop.f32.mrb[0].mxu0
  %v561 = vadd.f32 0.0, %v560
  %v562 = vpop.f32.mrb[0].mxu0
  %563 = vmatprep.mubr.bf16.mxu0 %v282
  %564 = vmatmul.mubr.bf16.gmra.mrb[0].mxu0 %v281
  %v565 = vpop.f32.mrb[0].mxu0
  %v566 = vadd.f32 0.0, %v565
  %v567 = vpop.f32.mrb[0].mxu0
  %v568 = vpop.f32.mrb[0].mxu0
  %v569 = vadd.f32 0.0, %v568
  %v570 = vpop.f32.mrb[0].mxu0
  %571 = vdwg.mxu0
  %v572 = vadd.f32 %v91, %v446
  %v573 = vadd.f32 %v92, %v449
  %v574 = vadd.f32 %v93, %v454
  %v575 = vadd.f32 %v94, %v457
  %v576 = vadd.f32 %v95, %v462
  %v577 = vadd.f32 %v96, %v465
  %v578 = vadd.f32 %v97, %v470
  %v579 = vadd.f32 %v98, %v473
  %v580 = vadd.f32 %v99, %v478
  %v581 = vadd.f32 %v100, %v481
  %v582 = vadd.f32 %v101, %v486
  %v583 = vadd.f32 %v102, %v489
  %v584 = vadd.f32 %v103, %v494
  %v585 = vadd.f32 %v104, %v497
  %v586 = vadd.f32 %v105, %v502
  %v587 = vadd.f32 %v106, %v505
  %v588 = vadd.f32 %v107, %v510
  %v589 = vadd.f32 %v108, %v513
  %v590 = vadd.f32 %v109, %v518
  %v591 = vadd.f32 %v110, %v521
  %v592 = vadd.f32 %v111, %v526
  %v593 = vadd.f32 %v112, %v529
  %v594 = vadd.f32 %v113, %v534
  %v595 = vadd.f32 %v114, %v537
  %v596 = vadd.f32 %v115, %v542
  %v597 = vadd.f32 %v116, %v545
  %v598 = vadd.f32 %v117, %v550
  %v599 = vadd.f32 %v118, %v553
  %v600 = vadd.f32 %v119, %v558
  %v601 = vadd.f32 %v120, %v561
  %v602 = vadd.f32 %v121, %v566
  %v603 = vadd.f32 %v122, %v569
  %604 = vst [vmem:[#allocation2] sm:$0xff] %v572
  %605 = vst [vmem:[#allocation2 + $0x8] sm:$0xff] %v573
  %606 = vst [vmem:[#allocation2 + $0x10] sm:$0xff] %v574
  %607 = vst [vmem:[#allocation2 + $0x18] sm:$0xff] %v575
  %608 = vst [vmem:[#allocation2 + $0x20] sm:$0xff] %v576
  %609 = vst [vmem:[#allocation2 + $0x28] sm:$0xff] %v577
  %610 = vst [vmem:[#allocation2 + $0x30] sm:$0xff] %v578
  %611 = vst [vmem:[#allocation2 + $0x38] sm:$0xff] %v579
  %612 = vst [vmem:[#allocation2 + $0x40] sm:$0xff] %v580
  %613 = vst [vmem:[#allocation2 + $0x48] sm:$0xff] %v581
  %614 = vst [vmem:[#allocation2 + $0x50] sm:$0xff] %v582
  %615 = vst [vmem:[#allocation2 + $0x58] sm:$0xff] %v583
  %616 = vst [vmem:[#allocation2 + $0x60] sm:$0xff] %v584
  %617 = vst [vmem:[#allocation2 + $0x68] sm:$0xff] %v585
  %618 = vst [vmem:[#allocation2 + $0x70] sm:$0xff] %v586
  %619 = vst [vmem:[#allocation2 + $0x78] sm:$0xff] %v587
  %620 = vst [vmem:[#allocation2 + $0x80] sm:$0xff] %v588
  %621 = vst [vmem:[#allocation2 + $0x88] sm:$0xff] %v589
  %622 = vst [vmem:[#allocation2 + $0x90] sm:$0xff] %v590
  %623 = vst [vmem:[#allocation2 + $0x98] sm:$0xff] %v591
  %624 = vst [vmem:[#allocation2 + $0xa0] sm:$0xff] %v592
  %625 = vst [vmem:[#allocation2 + $0xa8] sm:$0xff] %v593
  %626 = vst [vmem:[#allocation2 + $0xb0] sm:$0xff] %v594
  %627 = vst [vmem:[#allocation2 + $0xb8] sm:$0xff] %v595
  %628 = vst [vmem:[#allocation2 + $0xc0] sm:$0xff] %v596
  %629 = vst [vmem:[#allocation2 + $0xc8] sm:$0xff] %v597
  %630 = vst [vmem:[#allocation2 + $0xd0] sm:$0xff] %v598
  %631 = vst [vmem:[#allocation2 + $0xd8] sm:$0xff] %v599
  %632 = vst [vmem:[#allocation2 + $0xe0] sm:$0xff] %v600
  %633 = vst [vmem:[#allocation2 + $0xe8] sm:$0xff] %v601
  %634 = vst [vmem:[#allocation2 + $0xf0] sm:$0xff] %v602
  %635 = vst [vmem:[#allocation2 + $0xf8] sm:$0xff] %v603
  // Predicated region
  $region22: #{gcn_multilayers_forward.5} parent=0 // pred_check
    %p636 = pneg %p18
  $region23: #{gcn_multilayers_forward.5} parent=0 // pred_check_branch
    %638 = sbr.rel (%p636) target = $region25
  $region24: #{gcn_multilayers_forward.5} parent=0 // pred_region
    %v639 = vld [vmem:[#allocation2] sm:$0xff]
    %v640 = vld [vmem:[#allocation2 + $0x8] sm:$0xff]
    %v641 = vld [vmem:[#allocation2 + $0x10] sm:$0xff]
    %v642 = vld [vmem:[#allocation2 + $0x18] sm:$0xff]
    %v643 = vld [vmem:[#allocation2 + $0x20] sm:$0xff]
    %v644 = vld [vmem:[#allocation2 + $0x28] sm:$0xff]
    %v645 = vld [vmem:[#allocation2 + $0x30] sm:$0xff]
    %v646 = vld [vmem:[#allocation2 + $0x38] sm:$0xff]
    %v647 = vld [vmem:[#allocation2 + $0x40] sm:$0xff]
    %v648 = vld [vmem:[#allocation2 + $0x48] sm:$0xff]
    %v649 = vld [vmem:[#allocation2 + $0x50] sm:$0xff]
    %v650 = vld [vmem:[#allocation2 + $0x58] sm:$0xff]
    %v651 = vld [vmem:[#allocation2 + $0x60] sm:$0xff]
    %v652 = vld [vmem:[#allocation2 + $0x68] sm:$0xff]
    %v653 = vld [vmem:[#allocation2 + $0x70] sm:$0xff]
    %v654 = vld [vmem:[#allocation2 + $0x78] sm:$0xff]
    %v655 = vld [vmem:[#allocation2 + $0x80] sm:$0xff]
    %v656 = vld [vmem:[#allocation2 + $0x88] sm:$0xff]
    %v657 = vld [vmem:[#allocation2 + $0x90] sm:$0xff]
    %v658 = vld [vmem:[#allocation2 + $0x98] sm:$0xff]
    %v659 = vld [vmem:[#allocation2 + $0xa0] sm:$0xff]
    %v660 = vld [vmem:[#allocation2 + $0xa8] sm:$0xff]
    %v661 = vld [vmem:[#allocation2 + $0xb0] sm:$0xff]
    %v662 = vld [vmem:[#allocation2 + $0xb8] sm:$0xff]
    %v663 = vld [vmem:[#allocation2 + $0xc0] sm:$0xff]
    %v664 = vld [vmem:[#allocation2 + $0xc8] sm:$0xff]
    %v665 = vld [vmem:[#allocation2 + $0xd0] sm:$0xff]
    %v666 = vld [vmem:[#allocation2 + $0xd8] sm:$0xff]
    %v667 = vld [vmem:[#allocation2 + $0xe0] sm:$0xff]
    %v668 = vld [vmem:[#allocation2 + $0xe8] sm:$0xff]
    %v669 = vld [vmem:[#allocation2 + $0xf0] sm:$0xff]
    %v670 = vld [vmem:[#allocation2 + $0xf8] sm:$0xff]
    %v671 = vld [vmem:[%s2] sm:$0xff]
    %v672 = vld [vmem:[%s2 + $0x8] sm:$0xff]
    %v673 = vld [vmem:[%s2 + $0x10] sm:$0xff]
    %v674 = vld [vmem:[%s2 + $0x18] sm:$0xff]
    %v675 = vld [vmem:[%s2 + $0x20] sm:$0xff]
    %v676 = vld [vmem:[%s2 + $0x28] sm:$0xff]
    %v677 = vld [vmem:[%s2 + $0x30] sm:$0xff]
    %v678 = vld [vmem:[%s2 + $0x38] sm:$0xff]
    %v679 = vld [vmem:[%s2 + $0x40] sm:$0xff]
    %v680 = vld [vmem:[%s2 + $0x48] sm:$0xff]
    %v681 = vld [vmem:[%s2 + $0x50] sm:$0xff]
    %v682 = vld [vmem:[%s2 + $0x58] sm:$0xff]
    %v683 = vld [vmem:[%s2 + $0x60] sm:$0xff]
    %v684 = vld [vmem:[%s2 + $0x68] sm:$0xff]
    %v685 = vld [vmem:[%s2 + $0x70] sm:$0xff]
    %v686 = vld [vmem:[%s2 + $0x78] sm:$0xff]
    %v687 = vld [vmem:[%s2 + $0x80] sm:$0xff]
    %v688 = vld [vmem:[%s2 + $0x88] sm:$0xff]
    %v689 = vld [vmem:[%s2 + $0x90] sm:$0xff]
    %v690 = vld [vmem:[%s2 + $0x98] sm:$0xff]
    %v691 = vld [vmem:[%s2 + $0xa0] sm:$0xff]
    %v692 = vld [vmem:[%s2 + $0xa8] sm:$0xff]
    %v693 = vld [vmem:[%s2 + $0xb0] sm:$0xff]
    %v694 = vld [vmem:[%s2 + $0xb8] sm:$0xff]
    %v695 = vld [vmem:[%s2 + $0xc0] sm:$0xff]
    %v696 = vld [vmem:[%s2 + $0xc8] sm:$0xff]
    %v697 = vld [vmem:[%s2 + $0xd0] sm:$0xff]
    %v698 = vld [vmem:[%s2 + $0xd8] sm:$0xff]
    %v699 = vld [vmem:[%s2 + $0xe0] sm:$0xff]
    %v700 = vld [vmem:[%s2 + $0xe8] sm:$0xff]
    %v701 = vld [vmem:[%s2 + $0xf0] sm:$0xff]
    %v702 = vld [vmem:[%s2 + $0xf8] sm:$0xff]
    %704 = vset.pattern.permute.xlu0 0
    %705 = vperm.xlu0 %704, %v671
    %v706 = vpop.permute.xlu0 %705
    %709 = vset.pattern.permute.xlu0 0
    %710 = vperm.xlu0 %709, %v672
    %v711 = vpop.permute.xlu0 %710
    %714 = vset.pattern.permute.xlu0 0
    %715 = vperm.xlu0 %714, %v673
    %v716 = vpop.permute.xlu0 %715
    %719 = vset.pattern.permute.xlu0 0
    %720 = vperm.xlu0 %719, %v674
    %v721 = vpop.permute.xlu0 %720
    %724 = vset.pattern.permute.xlu0 0
    %725 = vperm.xlu0 %724, %v675
    %v726 = vpop.permute.xlu0 %725
    %729 = vset.pattern.permute.xlu0 0
    %730 = vperm.xlu0 %729, %v676
    %v731 = vpop.permute.xlu0 %730
    %734 = vset.pattern.permute.xlu0 0
    %735 = vperm.xlu0 %734, %v677
    %v736 = vpop.permute.xlu0 %735
    %739 = vset.pattern.permute.xlu0 0
    %740 = vperm.xlu0 %739, %v678
    %v741 = vpop.permute.xlu0 %740
    %744 = vset.pattern.permute.xlu0 0
    %745 = vperm.xlu0 %744, %v679
    %v746 = vpop.permute.xlu0 %745
    %749 = vset.pattern.permute.xlu0 0
    %750 = vperm.xlu0 %749, %v680
    %v751 = vpop.permute.xlu0 %750
    %754 = vset.pattern.permute.xlu0 0
    %755 = vperm.xlu0 %754, %v681
    %v756 = vpop.permute.xlu0 %755
    %759 = vset.pattern.permute.xlu0 0
    %760 = vperm.xlu0 %759, %v682
    %v761 = vpop.permute.xlu0 %760
    %764 = vset.pattern.permute.xlu0 0
    %765 = vperm.xlu0 %764, %v683
    %v766 = vpop.permute.xlu0 %765
    %769 = vset.pattern.permute.xlu0 0
    %770 = vperm.xlu0 %769, %v684
    %v771 = vpop.permute.xlu0 %770
    %774 = vset.pattern.permute.xlu0 0
    %775 = vperm.xlu0 %774, %v685
    %v776 = vpop.permute.xlu0 %775
    %779 = vset.pattern.permute.xlu0 0
    %780 = vperm.xlu0 %779, %v686
    %v781 = vpop.permute.xlu0 %780
    %784 = vset.pattern.permute.xlu0 0
    %785 = vperm.xlu0 %784, %v687
    %v786 = vpop.permute.xlu0 %785
    %789 = vset.pattern.permute.xlu0 0
    %790 = vperm.xlu0 %789, %v688
    %v791 = vpop.permute.xlu0 %790
    %794 = vset.pattern.permute.xlu0 0
    %795 = vperm.xlu0 %794, %v689
    %v796 = vpop.permute.xlu0 %795
    %799 = vset.pattern.permute.xlu0 0
    %800 = vperm.xlu0 %799, %v690
    %v801 = vpop.permute.xlu0 %800
    %804 = vset.pattern.permute.xlu0 0
    %805 = vperm.xlu0 %804, %v691
    %v806 = vpop.permute.xlu0 %805
    %809 = vset.pattern.permute.xlu0 0
    %810 = vperm.xlu0 %809, %v692
    %v811 = vpop.permute.xlu0 %810
    %814 = vset.pattern.permute.xlu0 0
    %815 = vperm.xlu0 %814, %v693
    %v816 = vpop.permute.xlu0 %815
    %819 = vset.pattern.permute.xlu0 0
    %820 = vperm.xlu0 %819, %v694
    %v821 = vpop.permute.xlu0 %820
    %824 = vset.pattern.permute.xlu0 0
    %825 = vperm.xlu0 %824, %v695
    %v826 = vpop.permute.xlu0 %825
    %829 = vset.pattern.permute.xlu0 0
    %830 = vperm.xlu0 %829, %v696
    %v831 = vpop.permute.xlu0 %830
    %834 = vset.pattern.permute.xlu0 0
    %835 = vperm.xlu0 %834, %v697
    %v836 = vpop.permute.xlu0 %835
    %839 = vset.pattern.permute.xlu0 0
    %840 = vperm.xlu0 %839, %v698
    %v841 = vpop.permute.xlu0 %840
    %844 = vset.pattern.permute.xlu0 0
    %845 = vperm.xlu0 %844, %v699
    %v846 = vpop.permute.xlu0 %845
    %849 = vset.pattern.permute.xlu0 0
    %850 = vperm.xlu0 %849, %v700
    %v851 = vpop.permute.xlu0 %850
    %854 = vset.pattern.permute.xlu0 0
    %855 = vperm.xlu0 %854, %v701
    %v856 = vpop.permute.xlu0 %855
    %859 = vset.pattern.permute.xlu0 0
    %860 = vperm.xlu0 %859, %v702
    %v861 = vpop.permute.xlu0 %860
    %v863 = vmul.f32 %v639, %v706
    %v864 = vmul.f32 %v640, %v711
    %v865 = vmul.f32 %v641, %v716
    %v866 = vmul.f32 %v642, %v721
    %v867 = vmul.f32 %v643, %v726
    %v868 = vmul.f32 %v644, %v731
    %v869 = vmul.f32 %v645, %v736
    %v870 = vmul.f32 %v646, %v741
    %v871 = vmul.f32 %v647, %v746
    %v872 = vmul.f32 %v648, %v751
    %v873 = vmul.f32 %v649, %v756
    %v874 = vmul.f32 %v650, %v761
    %v875 = vmul.f32 %v651, %v766
    %v876 = vmul.f32 %v652, %v771
    %v877 = vmul.f32 %v653, %v776
    %v878 = vmul.f32 %v654, %v781
    %v879 = vmul.f32 %v655, %v786
    %v880 = vmul.f32 %v656, %v791
    %v881 = vmul.f32 %v657, %v796
    %v882 = vmul.f32 %v658, %v801
    %v883 = vmul.f32 %v659, %v806
    %v884 = vmul.f32 %v660, %v811
    %v885 = vmul.f32 %v661, %v816
    %v886 = vmul.f32 %v662, %v821
    %v887 = vmul.f32 %v663, %v826
    %v888 = vmul.f32 %v664, %v831
    %v889 = vmul.f32 %v665, %v836
    %v890 = vmul.f32 %v666, %v841
    %v891 = vmul.f32 %v667, %v846
    %v892 = vmul.f32 %v668, %v851
    %v893 = vmul.f32 %v669, %v856
    %v894 = vmul.f32 %v670, %v861
    %v895 = vld [vmem:[%s3] sm:$0x1]
    %v897 = vlaneseq
    %v898 = vshrl.u32 %v897, 7
    %v899 = vsub.s32 0, %v898
    %v900 = vrot.slane %v895, %v899
    %v902 = vadd.f32 %v863, %v900
    %v903 = vadd.f32 %v864, %v900
    %v904 = vadd.f32 %v865, %v900
    %v905 = vadd.f32 %v866, %v900
    %v906 = vadd.f32 %v867, %v900
    %v907 = vadd.f32 %v868, %v900
    %v908 = vadd.f32 %v869, %v900
    %v909 = vadd.f32 %v870, %v900
    %v910 = vadd.f32 %v871, %v900
    %v911 = vadd.f32 %v872, %v900
    %v912 = vadd.f32 %v873, %v900
    %v913 = vadd.f32 %v874, %v900
    %v914 = vadd.f32 %v875, %v900
    %v915 = vadd.f32 %v876, %v900
    %v916 = vadd.f32 %v877, %v900
    %v917 = vadd.f32 %v878, %v900
    %v918 = vadd.f32 %v879, %v900
    %v919 = vadd.f32 %v880, %v900
    %v920 = vadd.f32 %v881, %v900
    %v921 = vadd.f32 %v882, %v900
    %v922 = vadd.f32 %v883, %v900
    %v923 = vadd.f32 %v884, %v900
    %v924 = vadd.f32 %v885, %v900
    %v925 = vadd.f32 %v886, %v900
    %v926 = vadd.f32 %v887, %v900
    %v927 = vadd.f32 %v888, %v900
    %v928 = vadd.f32 %v889, %v900
    %v929 = vadd.f32 %v890, %v900
    %v930 = vadd.f32 %v891, %v900
    %v931 = vadd.f32 %v892, %v900
    %v932 = vadd.f32 %v893, %v900
    %v933 = vadd.f32 %v894, %v900
    %v934 = vpack.c.bf16 %v903, %v902
    %v935 = vpack.c.bf16 %v905, %v904
    %v936 = vpack.c.bf16 %v907, %v906
    %v937 = vpack.c.bf16 %v909, %v908
    %v938 = vpack.c.bf16 %v911, %v910
    %v939 = vpack.c.bf16 %v913, %v912
    %v940 = vpack.c.bf16 %v915, %v914
    %v941 = vpack.c.bf16 %v917, %v916
    %v942 = vpack.c.bf16 %v919, %v918
    %v943 = vpack.c.bf16 %v921, %v920
    %v944 = vpack.c.bf16 %v923, %v922
    %v945 = vpack.c.bf16 %v925, %v924
    %v946 = vpack.c.bf16 %v927, %v926
    %v947 = vpack.c.bf16 %v929, %v928
    %v948 = vpack.c.bf16 %v931, %v930
    %v949 = vpack.c.bf16 %v933, %v932
    %v966 = vunpack.c.l.b16 %v934
    %v967 = vunpack.c.h.b16 %v934
    %v968 = vunpack.c.l.b16 %v935
    %v969 = vunpack.c.h.b16 %v935
    %v970 = vunpack.c.l.b16 %v936
    %v971 = vunpack.c.h.b16 %v936
    %v972 = vunpack.c.l.b16 %v937
    %v973 = vunpack.c.h.b16 %v937
    %v974 = vunpack.c.l.b16 %v938
    %v975 = vunpack.c.h.b16 %v938
    %v976 = vunpack.c.l.b16 %v939
    %v977 = vunpack.c.h.b16 %v939
    %v978 = vunpack.c.l.b16 %v940
    %v979 = vunpack.c.h.b16 %v940
    %v980 = vunpack.c.l.b16 %v941
    %v981 = vunpack.c.h.b16 %v941
    %v982 = vunpack.c.l.b16 %v942
    %v983 = vunpack.c.h.b16 %v942
    %v984 = vunpack.c.l.b16 %v943
    %v985 = vunpack.c.h.b16 %v943
    %v986 = vunpack.c.l.b16 %v944
    %v987 = vunpack.c.h.b16 %v944
    %v988 = vunpack.c.l.b16 %v945
    %v989 = vunpack.c.h.b16 %v945
    %v990 = vunpack.c.l.b16 %v946
    %v991 = vunpack.c.h.b16 %v946
    %v992 = vunpack.c.l.b16 %v947
    %v993 = vunpack.c.h.b16 %v947
    %v994 = vunpack.c.l.b16 %v948
    %v995 = vunpack.c.h.b16 %v948
    %v996 = vunpack.c.l.b16 %v949
    %v997 = vunpack.c.h.b16 %v949
    %v998 = vpack.c.b16 %v966, %v966
    %v999 = vpack.c.b16 %v967, %v967
    %v1000 = vpack.c.b16 %v968, %v968
    %v1001 = vpack.c.b16 %v969, %v969
    %v1002 = vpack.c.b16 %v970, %v970
    %v1003 = vpack.c.b16 %v971, %v971
    %v1004 = vpack.c.b16 %v972, %v972
    %v1005 = vpack.c.b16 %v973, %v973
    %v1006 = vpack.c.b16 %v974, %v974
    %v1007 = vpack.c.b16 %v975, %v975
    %v1008 = vpack.c.b16 %v976, %v976
    %v1009 = vpack.c.b16 %v977, %v977
    %v1010 = vpack.c.b16 %v978, %v978
    %v1011 = vpack.c.b16 %v979, %v979
    %v1012 = vpack.c.b16 %v980, %v980
    %v1013 = vpack.c.b16 %v981, %v981
    %v1014 = vpack.c.b16 %v982, %v982
    %v1015 = vpack.c.b16 %v983, %v983
    %v1016 = vpack.c.b16 %v984, %v984
    %v1017 = vpack.c.b16 %v985, %v985
    %v1018 = vpack.c.b16 %v986, %v986
    %v1019 = vpack.c.b16 %v987, %v987
    %v1020 = vpack.c.b16 %v988, %v988
    %v1021 = vpack.c.b16 %v989, %v989
    %v1022 = vpack.c.b16 %v990, %v990
    %v1023 = vpack.c.b16 %v991, %v991
    %v1024 = vpack.c.b16 %v992, %v992
    %v1025 = vpack.c.b16 %v993, %v993
    %v1026 = vpack.c.b16 %v994, %v994
    %v1027 = vpack.c.b16 %v995, %v995
    %v1028 = vpack.c.b16 %v996, %v996
    %v1029 = vpack.c.b16 %v997, %v997
    %1062 = vst [vmem:[%s4] sm:$0xf] %v998
    %1063 = vst [vmem:[%s4 + $0x4] sm:$0xf] %v999
    %1064 = vst [vmem:[%s4 + $0x8] sm:$0xf] %v1000
    %1065 = vst [vmem:[%s4 + $0xc] sm:$0xf] %v1001
    %1066 = vst [vmem:[%s4 + $0x10] sm:$0xf] %v1002
    %1067 = vst [vmem:[%s4 + $0x14] sm:$0xf] %v1003
    %1068 = vst [vmem:[%s4 + $0x18] sm:$0xf] %v1004
    %1069 = vst [vmem:[%s4 + $0x1c] sm:$0xf] %v1005
    %1070 = vst [vmem:[%s4 + $0x20] sm:$0xf] %v1006
    %1071 = vst [vmem:[%s4 + $0x24] sm:$0xf] %v1007
    %1072 = vst [vmem:[%s4 + $0x28] sm:$0xf] %v1008
    %1073 = vst [vmem:[%s4 + $0x2c] sm:$0xf] %v1009
    %1074 = vst [vmem:[%s4 + $0x30] sm:$0xf] %v1010
    %1075 = vst [vmem:[%s4 + $0x34] sm:$0xf] %v1011
    %1076 = vst [vmem:[%s4 + $0x38] sm:$0xf] %v1012
    %1077 = vst [vmem:[%s4 + $0x3c] sm:$0xf] %v1013
    %1078 = vst [vmem:[%s4 + $0x40] sm:$0xf] %v1014
    %1079 = vst [vmem:[%s4 + $0x44] sm:$0xf] %v1015
    %1080 = vst [vmem:[%s4 + $0x48] sm:$0xf] %v1016
    %1081 = vst [vmem:[%s4 + $0x4c] sm:$0xf] %v1017
    %1082 = vst [vmem:[%s4 + $0x50] sm:$0xf] %v1018
    %1083 = vst [vmem:[%s4 + $0x54] sm:$0xf] %v1019
    %1084 = vst [vmem:[%s4 + $0x58] sm:$0xf] %v1020
    %1085 = vst [vmem:[%s4 + $0x5c] sm:$0xf] %v1021
    %1086 = vst [vmem:[%s4 + $0x60] sm:$0xf] %v1022
    %1087 = vst [vmem:[%s4 + $0x64] sm:$0xf] %v1023
    %1088 = vst [vmem:[%s4 + $0x68] sm:$0xf] %v1024
    %1089 = vst [vmem:[%s4 + $0x6c] sm:$0xf] %v1025
    %1090 = vst [vmem:[%s4 + $0x70] sm:$0xf] %v1026
    %1091 = vst [vmem:[%s4 + $0x74] sm:$0xf] %v1027
    %1092 = vst [vmem:[%s4 + $0x78] sm:$0xf] %v1028
    %1093 = vst [vmem:[%s4 + $0x7c] sm:$0xf] %v1029
  $region25: #{gcn_multilayers_forward.5} parent=0 // pred_fallthru
    _
  // Predicated region
  $region26: #{gcn_multilayers_forward.5} parent=0 // pred_check
    _
  $region27: #{gcn_multilayers_forward.5} parent=0 // pred_check_branch
    %1095 = sbr.rel (0) target = $region29
  $region28: #{gcn_multilayers_forward.5} parent=0 // pred_region
    _
  $region29: #{gcn_multilayers_forward.5} parent=0 // pred_fallthru
    _
  // Predicated region
  $region30: #{gcn_multilayers_forward.5} parent=0 // pred_check
    _
  $region31: #{gcn_multilayers_forward.5} parent=0 // pred_check_branch
    %1097 = sbr.rel (0) target = $region33
  $region32: #{gcn_multilayers_forward.5} parent=0 // pred_region
    _
  $region33: #{gcn_multilayers_forward.5} parent=0 // pred_fallthru
    _

</llo_original>
